<compile_context>
chip_gen: v7x
topology: tpu7x:2x2x1
jax: 0.10.0
libtpu: 0.0.40
codegen_flags: <defaults>
</compile_context>

<pallas_src>
import functools
import math

import jax
import jax.numpy as jnp
from jax.experimental import pallas as pl
from jax.experimental.pallas import tpu as pltpu

_OUT_LANES = 128          # lane-dense padded output width (exactly one lane group)
_EPS_NORM = 1e-12
_EPS_DEG = 1e-6
_PAD_NEG = -1e4           # sigmoid(-1e4) == 0 -> padded rows vanish everywhere
_VMEM_LIMIT = 32 * 1024 * 1024


def _round_up(x, m):
    return (x + m - 1) // m * m


def _feat_fn(a_ref, sel_ref, vw, h):
    """Sigmoid views -> weighted cross features via MXU selection matmuls.

    feat[:, i*h*h + j*h + k] = vw * s0[:, i] * s1[:, j] * s2[:, k]
    (vw = view_weight[0] * view_weight[1]; scalar factors commute through the
     outer product, so folding them into s0 matches the reference exactly —
     do NOT "re-fix" this.)
    """
    a = a_ref[...]                                  # (tm, 3h) f32, single DMA
    s0 = jax.nn.sigmoid(a[:, 0 * h:1 * h]) * vw
    s1 = jax.nn.sigmoid(a[:, 1 * h:2 * h])
    s2 = jax.nn.sigmoid(a[:, 2 * h:3 * h])
    # Constant 0/1 selection matrices expand (tm, h) -> lane-dense (tm, h**3)
    # on the otherwise-idle MXU instead of VALU/XLU slice-and-concat work.
    e0 = jnp.dot(s0, sel_ref[0 * h:1 * h, :], preferred_element_type=jnp.float32)
    e1 = jnp.dot(s1, sel_ref[1 * h:2 * h, :], preferred_element_type=jnp.float32)
    e2 = jnp.dot(s2, sel_ref[2 * h:3 * h, :], preferred_element_type=jnp.float32)
    feat = e0 * e1 * e2                             # (tm, h**3) f32
    sq = jnp.sum(feat * feat, axis=-1, keepdims=True)
    fn = feat * jax.lax.rsqrt(sq + _EPS_NORM)       # row-normalized features
    return feat, fn


def _vcdn_kernel(a_ref, sel_ref, wf_ref, bf_ref, out_ref,
                 c_scr, y_scr, ybf_scr, *, vw, h, n_tiles):
    p = pl.program_id(0)      # phase: 0 colsum, 1 y-accumulate, 2 outputs
    i = pl.program_id(1)      # row tile

    @pl.when(jnp.logical_and(p == 0, i == 0))
    def _init():
        c_scr[...] = jnp.zeros_like(c_scr)
        y_scr[...] = jnp.zeros_like(y_scr)

    feat, fn = _feat_fn(a_ref, sel_ref, vw, h)

    def _scaled_support():
        # d = rsqrt(degree), s = d * (feat @ W_fold)
        deg = jnp.sum(fn * c_scr[...], axis=-1, keepdims=True) + 1.0   # self-loop
        d = jax.lax.rsqrt(jnp.maximum(deg, _EPS_DEG))
        support = jnp.dot(feat.astype(jnp.bfloat16), wf_ref[...],
                          preferred_element_type=jnp.float32)          # (tm, OUT)
        return d, d * support

    @pl.when(p == 0)
    def _phase0():
        # Padded rows have fn == 0 (inputs padded with _PAD_NEG), so no mask.
        c_scr[...] += jnp.sum(fn, axis=0, keepdims=True)

    @pl.when(p == 1)
    def _phase1():
        _, s = _scaled_support()
        # y += fn^T @ s without materializing an explicit (tm, F) transpose.
        y_scr[...] += jax.lax.dot_general(
            fn.astype(jnp.bfloat16), s.astype(jnp.bfloat16),
            dimension_numbers=(((0,), (0,)), ((), ())),
            preferred_element_type=jnp.float32)

        @pl.when(i == n_tiles - 1)
        def _finalize_y():
            # Cast the f32 accumulator once; phase 2 reads bf16 directly.
            ybf_scr[...] = y_scr[...].astype(jnp.bfloat16)

    @pl.when(p == 2)
    def _phase2():
        d, s = _scaled_support()
        agg = jnp.dot(fn.astype(jnp.bfloat16), ybf_scr[...],
                      preferred_element_type=jnp.float32) + s
        out_ref[...] = d * agg + bf_ref[...]


# ---------------------------------------------------------------------------
# Wrapper (param folding, padding and BlockSpec plumbing only).
# ---------------------------------------------------------------------------
def vcdn_forward(in_list, params, view_weight):
    a0, a1, a2 = [jnp.asarray(x, jnp.float32) for x in in_list]
    n, h = a0.shape
    f = h ** 3
    gcw, gcb, linw, linb = params
    out_dim = linw.shape[1]
    vw = float(view_weight[0]) * float(view_weight[1])

    # Eval-mode fold (dropout == identity): GC weight and Linear fuse.  Output
    # width padded to exactly one lane group so every store is lane-dense.
    out_pad = _round_up(max(out_dim, 1), _OUT_LANES)
    wf = jnp.zeros((f, out_pad), jnp.float32).at[:, :out_dim].set(
        jnp.dot(gcw, linw)).astype(jnp.bfloat16)
    bf = jnp.zeros((1, out_pad), jnp.float32).at[:, :out_dim].set(
        jnp.dot(gcb, linw) + linb)

    # Constant 0/1 selection matrices: row r of block v is 1 wherever the
    # cross-feature column uses index r of view v.
    cols = jnp.arange(f, dtype=jnp.int32)[None, :]
    rows = jnp.arange(h, dtype=jnp.int32)[:, None]
    sel = jnp.concatenate([
        (rows == cols // (h * h)).astype(jnp.float32),
        (rows == (cols // h) % h).astype(jnp.float32),
        (rows == cols % h).astype(jnp.float32),
    ], axis=0)                                               # (3h, f)

    # Row tiling: one tile for typical (small) N, 512-row tiles otherwise.
    # (VMEM footprint at tm=512 is only a few MiB, safe on v5e/v6e/v7x.)
    tm = _round_up(max(n, 8), 8) if n <= 512 else 512
    n_pad = _round_up(n, tm)
    n_tiles = n_pad // tm

    a_all = jnp.concatenate([a0, a1, a2], axis=-1)           # (n, 3h): 1 DMA/tile
    if n_pad != n:
        # sigmoid(_PAD_NEG) == 0 -> padded rows produce all-zero features and
        # never contribute to colsum / y, so no in-kernel masking is needed.
        a_all = jnp.pad(a_all, ((0, n_pad - n), (0, 0)),
                        constant_values=_PAD_NEG)

    grid = (3, n_tiles)   # phase-major: colsum -> y accumulate -> outputs
    row_spec = pl.BlockSpec((tm, 3 * h), lambda p, i: (i, 0))
    sel_spec = pl.BlockSpec((3 * h, f), lambda p, i: (0, 0))
    wf_spec = pl.BlockSpec((f, out_pad), lambda p, i: (0, 0))
    b_spec = pl.BlockSpec((1, out_pad), lambda p, i: (0, 0))
    # Phases 0/1 park their (never-read) output block in a dump slot past the
    # real rows, so every real output block is written exactly once (phase 2)
    # and there are no revisit/writeback ordering hazards.
    out_spec = pl.BlockSpec(
        (tm, out_pad), lambda p, i: (jnp.where(p == 2, i, n_tiles), 0))

    out = pl.pallas_call(
        functools.partial(_vcdn_kernel, vw=vw, h=h, n_tiles=n_tiles),
        grid=grid,
        in_specs=[row_spec, sel_spec, wf_spec, b_spec],
        out_specs=out_spec,
        out_shape=jax.ShapeDtypeStruct((n_pad + tm, out_pad), jnp.float32),
        scratch_shapes=[
            pltpu.VMEM((1, f), jnp.float32),         # c = colsum(fn)
            pltpu.VMEM((f, out_pad), jnp.float32),   # y = fn^T @ s (f32 accum)
            pltpu.VMEM((f, out_pad), jnp.bfloat16),  # y cast once for phase 2
        ],
        compiler_params=pltpu.CompilerParams(
            dimension_semantics=("arbitrary", "arbitrary"),
            vmem_limit_bytes=_VMEM_LIMIT),
    )(a_all, sel, wf, bf)

    return out[:n, :out_dim]


# ---------------------------------------------------------------------------
# Pure-JAX dense reference (same stand-in adjacency) for validation.
# ---------------------------------------------------------------------------
def vcdn_reference(in_list, params, view_weight):
    a0, a1, a2 = [jnp.asarray(x, jnp.float32) for x in in_list]
    n, h = a0.shape
    s0, s1, s2 = jax.nn.sigmoid(a0), jax.nn.sigmoid(a1), jax.nn.sigmoid(a2)
    vw0, vw1 = float(view_weight[0]), float(view_weight[1])
    x = jnp.matmul(s0[:, :, None], vw0 * s1[:, None, :]).reshape(n, h * h, 1)
    feat = jnp.matmul(x, vw1 * s2[:, None, :]).reshape(n, h ** 3)

    fn = feat * jax.lax.rsqrt(jnp.sum(feat * feat, -1, keepdims=True) + _EPS_NORM)
    sim = fn @ fn.T
    a_hat = sim + jnp.eye(n, dtype=jnp.float32)
    d = jax.lax.rsqrt(jnp.maximum(jnp.sum(a_hat, -1, keepdims=True), _EPS_DEG))
    adj = a_hat * d * d.T

    gcw, gcb, linw, linb = params
    gc_out = adj @ (feat @ gcw) + gcb
    return gc_out @ linw + linb


def init_params(key, h, num_view, vcdn_dim, out_dim):
    f = h ** num_view
    k1, k2, k3 = jax.random.split(key, 3)
    # GraphConvolution.weight: xavier_normal_(in=f, out=vcdn_dim); bias zeros.
    gcw = jax.random.normal(k1, (f, vcdn_dim), jnp.float32) * math.sqrt(
        2.0 / (f + vcdn_dim))
    gcb = jnp.zeros((1, vcdn_dim), jnp.float32)
    # nn.Linear(vcdn_dim, out_dim): uniform(-1/sqrt(fan_in), 1/sqrt(fan_in)).
    bound = 1.0 / math.sqrt(vcdn_dim)
    linw = jax.random.uniform(k2, (vcdn_dim, out_dim), jnp.float32,
                              minval=-bound, maxval=bound)
    linb = jax.random.uniform(k3, (1, out_dim), jnp.float32,
                              minval=-bound, maxval=bound)
    return gcw, gcb, linw, linb


if __name__ == "__main__":
    # 3 views, 8 samples, hidden_dim[0][-1] = 8 -> VCDN feature dim 8**3 = 512,
    # vcdn_dim = 32, out_dim = 4, view_weight = [0.5, 0.8], eval-mode dropout.
    num_view, n, h, vcdn_dim, out_dim = 3, 8, 8, 32, 4
    view_weight = [0.5, 0.8]

    key = jax.random.PRNGKey(0)
    kp, k0, k1, k2 = jax.random.split(key, 4)
    params = init_params(kp, h, num_view, vcdn_dim, out_dim)
    in_list = [
        jax.random.normal(k0, (n, h), jnp.float32),
        jax.random.normal(k1, (n, h), jnp.float32),
        jax.random.normal(k2, (n, h), jnp.float32),
    ]

    out = vcdn_forward(in_list, params, view_weight)
    jax.block_until_ready(out)
    assert out.shape == (n, out_dim) and out.dtype == jnp.float32

    ref = vcdn_reference(in_list, params, view_weight)
    max_err = float(jnp.max(jnp.abs(out - ref)))
    assert max_err < 5e-2, f"mismatch vs dense reference: max abs err {max_err}"
    print("KERNEL_OK")
</pallas_src>

<mosaic_0001>
module attributes {stable_mosaic.version = 11 : i64} {
  func.func @_vcdn_kernel(%arg0: i32, %arg1: i32, %arg2: memref<8x24xf32, #tpu.memory_space<vmem>>, %arg3: memref<24x512xf32, #tpu.memory_space<vmem>>, %arg4: memref<512x128xbf16, #tpu.memory_space<vmem>>, %arg5: memref<1x128xf32, #tpu.memory_space<vmem>>, %arg6: memref<8x128xf32, #tpu.memory_space<vmem>>, %arg7: memref<1x512xf32, #tpu.memory_space<vmem>>, %arg8: memref<512x128xf32, #tpu.memory_space<vmem>>, %arg9: memref<512x128xbf16, #tpu.memory_space<vmem>>) attributes {dimension_semantics = [#tpu.dimension_semantics<arbitrary>, #tpu.dimension_semantics<arbitrary>], iteration_bounds = array<i64: 3, 1>, scalar_prefetch = 0 : i64, scratch_operands = 3 : i64, tpu.core_type = #tpu.core_type<tc>, window_params = [{transform_indices = @transform_0, window_bounds = array<i64: 8, 24>}, {pipeline_mode = #tpu.pipeline_mode<synchronous>, transform_indices = @transform_1, window_bounds = array<i64: 24, 512>}, {pipeline_mode = #tpu.pipeline_mode<synchronous>, transform_indices = @transform_2, window_bounds = array<i64: 512, 128>}, {pipeline_mode = #tpu.pipeline_mode<synchronous>, transform_indices = @transform_3, window_bounds = array<i64: 1, 128>}, {transform_indices = @transform_4, window_bounds = array<i64: 8, 128>}]} {
    %c0_i32 = arith.constant 0 : i32
    %0 = arith.cmpi eq, %arg0, %c0_i32 : i32
    %c0_i32_0 = arith.constant 0 : i32
    %1 = arith.cmpi eq, %arg1, %c0_i32_0 : i32
    %2 = arith.andi %0, %1 : i1
    %3 = arith.extui %2 : i1 to i32
    %c0_i32_1 = arith.constant 0 : i32
    %4 = arith.cmpi ne, %3, %c0_i32_1 : i32
    scf.if %4 {
      %cst_19 = arith.constant 0.000000e+00 : f32
      %51 = vector.broadcast %cst_19 : f32 to vector<1x512xf32>
      %c0_20 = arith.constant 0 : index
      %c0_21 = arith.constant 0 : index
      %52 = vector.load %arg7[%c0_20, %c0_21] : memref<1x512xf32, #tpu.memory_space<vmem>>, vector<1x512xf32>
      tpu.vector_store %arg7[%c0_20, %c0_21], %51 {strides = array<i32>} : memref<1x512xf32, #tpu.memory_space<vmem>>, vector<1x512xf32>,
      %cst_22 = arith.constant 0.000000e+00 : f32
      %53 = vector.broadcast %cst_22 : f32 to vector<512x128xf32>
      %c0_23 = arith.constant 0 : index
      %c0_24 = arith.constant 0 : index
      %54 = vector.load %arg8[%c0_23, %c0_24] : memref<512x128xf32, #tpu.memory_space<vmem>>, vector<512x128xf32>
      tpu.vector_store %arg8[%c0_23, %c0_24], %53 {strides = array<i32>} : memref<512x128xf32, #tpu.memory_space<vmem>>, vector<512x128xf32>,
    } else {
    }
    %c0 = arith.constant 0 : index
    %c0_2 = arith.constant 0 : index
    %5 = vector.load %arg2[%c0, %c0_2] : memref<8x24xf32, #tpu.memory_space<vmem>>, vector<8x24xf32>
    %6 = vector.extract_strided_slice %5 {offsets = [0, 0], sizes = [8, 8], strides = [1, 1]} : vector<8x24xf32> to vector<8x8xf32>
    %7 = arith.negf %6 : vector<8x8xf32>
    %8 = math.exp %7 : vector<8x8xf32>
    %cst = arith.constant 1.000000e+00 : f32
    %9 = vector.broadcast %cst : f32 to vector<8x8xf32>
    %10 = arith.addf %9, %8 : vector<8x8xf32>
    %11 = arith.divf %9, %10 : vector<8x8xf32>
    %cst_3 = arith.constant 4.000000e-01 : f32
    %12 = vector.broadcast %cst_3 : f32 to vector<8x8xf32>
    %13 = arith.mulf %11, %12 : vector<8x8xf32>
    %14 = vector.extract_strided_slice %5 {offsets = [0, 8], sizes = [8, 8], strides = [1, 1]} : vector<8x24xf32> to vector<8x8xf32>
    %15 = arith.negf %14 : vector<8x8xf32>
    %16 = math.exp %15 : vector<8x8xf32>
    %cst_4 = arith.constant 1.000000e+00 : f32
    %17 = vector.broadcast %cst_4 : f32 to vector<8x8xf32>
    %18 = arith.addf %17, %16 : vector<8x8xf32>
    %19 = arith.divf %17, %18 : vector<8x8xf32>
    %20 = vector.extract_strided_slice %5 {offsets = [0, 16], sizes = [8, 8], strides = [1, 1]} : vector<8x24xf32> to vector<8x8xf32>
    %21 = arith.negf %20 : vector<8x8xf32>
    %22 = math.exp %21 : vector<8x8xf32>
    %cst_5 = arith.constant 1.000000e+00 : f32
    %23 = vector.broadcast %cst_5 : f32 to vector<8x8xf32>
    %24 = arith.addf %23, %22 : vector<8x8xf32>
    %25 = arith.divf %23, %24 : vector<8x8xf32>
    %c0_6 = arith.constant 0 : index
    %c0_7 = arith.constant 0 : index
    %26 = vector.load %arg3[%c0_6, %c0_7] : memref<24x512xf32, #tpu.memory_space<vmem>>, vector<8x512xf32>
    %cst_8 = arith.constant dense<0.000000e+00> : vector<8x512xf32>
    %27 = tpu.matmul %13, %26, %cst_8 {dimension_numbers = #tpu.dot_dimension_numbers<[1], [0], [0], [1], [0, 0, 1, 1], [], []>} : vector<8x8xf32>, vector<8x512xf32>, vector<8x512xf32> -> vector<8x512xf32>
    %c8 = arith.constant 8 : index
    %c0_9 = arith.constant 0 : index
    %28 = vector.load %arg3[%c8, %c0_9] : memref<24x512xf32, #tpu.memory_space<vmem>>, vector<8x512xf32>
    %cst_10 = arith.constant dense<0.000000e+00> : vector<8x512xf32>
    %29 = tpu.matmul %19, %28, %cst_10 {dimension_numbers = #tpu.dot_dimension_numbers<[1], [0], [0], [1], [0, 0, 1, 1], [], []>} : vector<8x8xf32>, vector<8x512xf32>, vector<8x512xf32> -> vector<8x512xf32>
    %c16 = arith.constant 16 : index
    %c0_11 = arith.constant 0 : index
    %30 = vector.load %arg3[%c16, %c0_11] : memref<24x512xf32, #tpu.memory_space<vmem>>, vector<8x512xf32>
    %cst_12 = arith.constant dense<0.000000e+00> : vector<8x512xf32>
    %31 = tpu.matmul %25, %30, %cst_12 {dimension_numbers = #tpu.dot_dimension_numbers<[1], [0], [0], [1], [0, 0, 1, 1], [], []>} : vector<8x8xf32>, vector<8x512xf32>, vector<8x512xf32> -> vector<8x512xf32>
    %32 = arith.mulf %27, %29 : vector<8x512xf32>
    %33 = arith.mulf %32, %31 : vector<8x512xf32>
    %34 = arith.mulf %33, %33 : vector<8x512xf32>
    %cst_13 = arith.constant dense<0.000000e+00> : vector<8xf32>
    %35 = vector.multi_reduction <add>, %34, %cst_13 [1] : vector<8x512xf32> to vector<8xf32>
    %36 = vector.shape_cast %35 : vector<8xf32> to vector<8x1xf32>
    %cst_14 = arith.constant 9.99999996E-13 : f32
    %37 = vector.broadcast %cst_14 : f32 to vector<8x1xf32>
    %38 = arith.addf %36, %37 : vector<8x1xf32>
    %39 = math.rsqrt %38 : vector<8x1xf32>
    %40 = vector.broadcast %39 : vector<8x1xf32> to vector<8x512xf32>
    %41 = arith.mulf %33, %40 : vector<8x512xf32>
    %c0_i32_15 = arith.constant 0 : i32
    %42 = arith.cmpi eq, %arg0, %c0_i32_15 : i32
    %43 = arith.extui %42 : i1 to i32
    %c0_i32_16 = arith.constant 0 : i32
    %44 = arith.cmpi ne, %43, %c0_i32_16 : i32
    scf.if %44 {
      %c0_19 = arith.constant 0 : index
      %c0_20 = arith.constant 0 : index
      %51 = vector.load %arg7[%c0_19, %c0_20] : memref<1x512xf32, #tpu.memory_space<vmem>>, vector<1x512xf32>
      %cst_21 = arith.constant dense<0.000000e+00> : vector<512xf32>
      %52 = vector.multi_reduction <add>, %41, %cst_21 [0] : vector<8x512xf32> to vector<512xf32>
      %53 = vector.shape_cast %52 : vector<512xf32> to vector<1x512xf32>
      %54 = arith.addf %51, %53 : vector<1x512xf32>
      %c0_22 = arith.constant 0 : index
      %c0_23 = arith.constant 0 : index
      %55 = vector.load %arg7[%c0_22, %c0_23] : memref<1x512xf32, #tpu.memory_space<vmem>>, vector<1x512xf32>
      tpu.vector_store %arg7[%c0_22, %c0_23], %54 {strides = array<i32>} : memref<1x512xf32, #tpu.memory_space<vmem>>, vector<1x512xf32>,
    } else {
    }
    %c1_i32 = arith.constant 1 : i32
    %45 = arith.cmpi eq, %arg0, %c1_i32 : i32
    %46 = arith.extui %45 : i1 to i32
    %c0_i32_17 = arith.constant 0 : i32
    %47 = arith.cmpi ne, %46, %c0_i32_17 : i32
    scf.if %47 {
      %c0_19 = arith.constant 0 : index
      %c0_20 = arith.constant 0 : index
      %51 = vector.load %arg7[%c0_19, %c0_20] : memref<1x512xf32, #tpu.memory_space<vmem>>, vector<1x512xf32>
      %52 = vector.broadcast %51 : vector<1x512xf32> to vector<8x512xf32>
      %53 = arith.mulf %41, %52 : vector<8x512xf32>
      %cst_21 = arith.constant dense<0.000000e+00> : vector<8xf32>
      %54 = vector.multi_reduction <add>, %53, %cst_21 [1] : vector<8x512xf32> to vector<8xf32>
      %55 = vector.shape_cast %54 : vector<8xf32> to vector<8x1xf32>
      %cst_22 = arith.constant 1.000000e+00 : f32
      %56 = vector.broadcast %cst_22 : f32 to vector<8x1xf32>
      %57 = arith.addf %55, %56 : vector<8x1xf32>
      %cst_23 = arith.constant 9.99999997E-7 : f32
      %58 = vector.broadcast %cst_23 : f32 to vector<8x1xf32>
      %59 = arith.maximumf %57, %58 : vector<8x1xf32>
      %60 = math.rsqrt %59 : vector<8x1xf32>
      %61 = arith.truncf %33 : vector<8x512xf32> to vector<8x512xbf16>
      %c0_24 = arith.constant 0 : index
      %c0_25 = arith.constant 0 : index
      %62 = vector.load %arg4[%c0_24, %c0_25] : memref<512x128xbf16, #tpu.memory_space<vmem>>, vector<512x128xbf16>
      %cst_26 = arith.constant dense<0.000000e+00> : vector<8x128xf32>
      %63 = tpu.matmul %61, %62, %cst_26 {dimension_numbers = #tpu.dot_dimension_numbers<[1], [0], [0], [1], [0, 0, 1, 1], [], []>} : vector<8x512xbf16>, vector<512x128xbf16>, vector<8x128xf32> -> vector<8x128xf32>
      %64 = vector.broadcast %60 : vector<8x1xf32> to vector<8x128xf32>
      %65 = arith.mulf %64, %63 : vector<8x128xf32>
      %c0_27 = arith.constant 0 : index
      %c0_28 = arith.constant 0 : index
      %66 = vector.load %arg8[%c0_27, %c0_28] : memref<512x128xf32, #tpu.memory_space<vmem>>, vector<512x128xf32>
      %67 = arith.truncf %41 : vector<8x512xf32> to vector<8x512xbf16>
      %68 = arith.truncf %65 : vector<8x128xf32> to vector<8x128xbf16>
      %cst_29 = arith.constant dense<0.000000e+00> : vector<512x128xf32>
      %69 = tpu.matmul %67, %68, %cst_29 {dimension_numbers = #tpu.dot_dimension_numbers<[0], [0], [1], [1], [0, 1, 1, 1], [], []>} : vector<8x512xbf16>, vector<8x128xbf16>, vector<512x128xf32> -> vector<512x128xf32>
      %70 = arith.addf %66, %69 : vector<512x128xf32>
      %c0_30 = arith.constant 0 : index
      %c0_31 = arith.constant 0 : index
      %71 = vector.load %arg8[%c0_30, %c0_31] : memref<512x128xf32, #tpu.memory_space<vmem>>, vector<512x128xf32>
      tpu.vector_store %arg8[%c0_30, %c0_31], %70 {strides = array<i32>} : memref<512x128xf32, #tpu.memory_space<vmem>>, vector<512x128xf32>,
      %c0_i32_32 = arith.constant 0 : i32
      %72 = arith.cmpi eq, %arg1, %c0_i32_32 : i32
      %73 = arith.extui %72 : i1 to i32
      %c0_i32_33 = arith.constant 0 : i32
      %74 = arith.cmpi ne, %73, %c0_i32_33 : i32
      scf.if %74 {
        %c0_34 = arith.constant 0 : index
        %c0_35 = arith.constant 0 : index
        %75 = vector.load %arg8[%c0_34, %c0_35] : memref<512x128xf32, #tpu.memory_space<vmem>>, vector<512x128xf32>
        %76 = arith.truncf %75 : vector<512x128xf32> to vector<512x128xbf16>
        %c0_36 = arith.constant 0 : index
        %c0_37 = arith.constant 0 : index
        %77 = vector.load %arg9[%c0_36, %c0_37] : memref<512x128xbf16, #tpu.memory_space<vmem>>, vector<512x128xbf16>
        tpu.vector_store %arg9[%c0_36, %c0_37], %76 {strides = array<i32>} : memref<512x128xbf16, #tpu.memory_space<vmem>>, vector<512x128xbf16>,
      } else {
      }
    } else {
    }
    %c2_i32 = arith.constant 2 : i32
    %48 = arith.cmpi eq, %arg0, %c2_i32 : i32
    %49 = arith.extui %48 : i1 to i32
    %c0_i32_18 = arith.constant 0 : i32
    %50 = arith.cmpi ne, %49, %c0_i32_18 : i32
    scf.if %50 {
      %c0_19 = arith.constant 0 : index
      %c0_20 = arith.constant 0 : index
      %51 = vector.load %arg7[%c0_19, %c0_20] : memref<1x512xf32, #tpu.memory_space<vmem>>, vector<1x512xf32>
      %52 = vector.broadcast %51 : vector<1x512xf32> to vector<8x512xf32>
      %53 = arith.mulf %41, %52 : vector<8x512xf32>
      %cst_21 = arith.constant dense<0.000000e+00> : vector<8xf32>
      %54 = vector.multi_reduction <add>, %53, %cst_21 [1] : vector<8x512xf32> to vector<8xf32>
      %55 = vector.shape_cast %54 : vector<8xf32> to vector<8x1xf32>
      %cst_22 = arith.constant 1.000000e+00 : f32
      %56 = vector.broadcast %cst_22 : f32 to vector<8x1xf32>
      %57 = arith.addf %55, %56 : vector<8x1xf32>
      %cst_23 = arith.constant 9.99999997E-7 : f32
      %58 = vector.broadcast %cst_23 : f32 to vector<8x1xf32>
      %59 = arith.maximumf %57, %58 : vector<8x1xf32>
      %60 = math.rsqrt %59 : vector<8x1xf32>
      %61 = arith.truncf %33 : vector<8x512xf32> to vector<8x512xbf16>
      %c0_24 = arith.constant 0 : index
      %c0_25 = arith.constant 0 : index
      %62 = vector.load %arg4[%c0_24, %c0_25] : memref<512x128xbf16, #tpu.memory_space<vmem>>, vector<512x128xbf16>
      %cst_26 = arith.constant dense<0.000000e+00> : vector<8x128xf32>
      %63 = tpu.matmul %61, %62, %cst_26 {dimension_numbers = #tpu.dot_dimension_numbers<[1], [0], [0], [1], [0, 0, 1, 1], [], []>} : vector<8x512xbf16>, vector<512x128xbf16>, vector<8x128xf32> -> vector<8x128xf32>
      %64 = vector.broadcast %60 : vector<8x1xf32> to vector<8x128xf32>
      %65 = arith.mulf %64, %63 : vector<8x128xf32>
      %66 = arith.truncf %41 : vector<8x512xf32> to vector<8x512xbf16>
      %c0_27 = arith.constant 0 : index
      %c0_28 = arith.constant 0 : index
      %67 = vector.load %arg9[%c0_27, %c0_28] : memref<512x128xbf16, #tpu.memory_space<vmem>>, vector<512x128xbf16>
      %cst_29 = arith.constant dense<0.000000e+00> : vector<8x128xf32>
      %68 = tpu.matmul %66, %67, %cst_29 {dimension_numbers = #tpu.dot_dimension_numbers<[1], [0], [0], [1], [0, 0, 1, 1], [], []>} : vector<8x512xbf16>, vector<512x128xbf16>, vector<8x128xf32> -> vector<8x128xf32>
      %69 = arith.addf %68, %65 : vector<8x128xf32>
      %70 = vector.broadcast %60 : vector<8x1xf32> to vector<8x128xf32>
      %71 = arith.mulf %70, %69 : vector<8x128xf32>
      %c0_30 = arith.constant 0 : index
      %c0_31 = arith.constant 0 : index
      %72 = vector.load %arg5[%c0_30, %c0_31] : memref<1x128xf32, #tpu.memory_space<vmem>>, vector<1x128xf32>
      %73 = vector.broadcast %72 : vector<1x128xf32> to vector<8x128xf32>
      %74 = arith.addf %71, %73 : vector<8x128xf32>
      %c0_32 = arith.constant 0 : index
      %c0_33 = arith.constant 0 : index
      %75 = vector.load %arg6[%c0_32, %c0_33] : memref<8x128xf32, #tpu.memory_space<vmem>>, vector<8x128xf32>
      tpu.vector_store %arg6[%c0_32, %c0_33], %74 {strides = array<i32>} : memref<8x128xf32, #tpu.memory_space<vmem>>, vector<8x128xf32>,
    } else {
    }
    return
  }
  func.func @transform_0(%arg0: i32, %arg1: i32) -> (i32, i32) {
    %c0_i32 = arith.constant 0 : i32
    %c0_i32_0 = arith.constant 0 : i32
    return %arg1, %c0_i32 : i32, i32
  }
  func.func @transform_1(%arg0: i32, %arg1: i32) -> (i32, i32) {
    %c0_i32 = arith.constant 0 : i32
    %c0_i32_0 = arith.constant 0 : i32
    %c0_i32_1 = arith.constant 0 : i32
    return %c0_i32, %c0_i32_0 : i32, i32
  }
  func.func @transform_2(%arg0: i32, %arg1: i32) -> (i32, i32) {
    %c0_i32 = arith.constant 0 : i32
    %c0_i32_0 = arith.constant 0 : i32
    %c0_i32_1 = arith.constant 0 : i32
    return %c0_i32, %c0_i32_0 : i32, i32
  }
  func.func @transform_3(%arg0: i32, %arg1: i32) -> (i32, i32) {
    %c0_i32 = arith.constant 0 : i32
    %c0_i32_0 = arith.constant 0 : i32
    %c0_i32_1 = arith.constant 0 : i32
    return %c0_i32, %c0_i32_0 : i32, i32
  }
  func.func @transform_4(%arg0: i32, %arg1: i32) -> (i32, i32) {
    %c2_i32 = arith.constant 2 : i32
    %0 = arith.cmpi eq, %arg0, %c2_i32 : i32
    %c1_i32 = arith.constant 1 : i32
    %1 = arith.select %0, %arg1, %c1_i32 : i32
    %c0_i32 = arith.constant 0 : i32
    %c0_i32_0 = arith.constant 0 : i32
    return %1, %c0_i32 : i32, i32
  }
}

</mosaic_0001>

<llo_original>
// kernel: tpu_custom_call.1
$region0: #{tpu_custom_call.1}
  #allocation0 [shape = 'u32[]', space=smem, size = 0x4, offset = 0x4, fixed_abs, tag = 'smem constant byte address 0x4 - core index']
  #allocation1 [shape = 'u32[144,128]{1,0:T(1,128)}', space=vmem, size = 0x12000, scoped, tag = 'internal scratch']
  #allocation2 [shape = 'f32[1,512]{1,0:T(1,128)}', space=vmem, size = 0x800, scoped, tag = 'scratch operand']
  #allocation3 [shape = 'f32[512,128]{1,0:T(8,128)}', space=vmem, size = 0x40000, scoped, tag = 'scratch operand']
  #allocation4 [shape = 'bf16[512,128]{1,0:T(16,128)(2,1)}', space=vmem, size = 0x20000, scoped, tag = 'scratch operand']
  %s0 = inlined_call_operand.hbm [shape: f32[8,24], index: 0, kind: input, shape index: {}]
  %s1 = inlined_call_operand.hbm [shape: f32[24,512], index: 1, kind: input, shape index: {}]
  %s2 = inlined_call_operand.hbm [shape: bf16[512,128], index: 2, kind: input, shape index: {}]
  %s3 = inlined_call_operand.vmem [shape: f32[1,128], index: 3, kind: input, shape index: {}]
  %s4 = inlined_call_operand.hbm [shape: f32[16,128], index: 4, kind: output, shape index: {}]
  %s5 = sld [smem:[#allocation0]]
  $region81: #{tpu_custom_call.1} parent=0
    _
  %s7 = ssub.s32 1, %s5
  %s8 = scalar_select 0, %s7, %s5
  $region1: #{tpu_custom_call.1} parent=0
    #allocation5 [shape = 'u8[4096]{0}', space=vmem, size = 0x1000, scoped, tag = 'input window, operand 0, single buffered']
    #allocation6 [shape = 's32[2]{0}', space=sflag, size = 0x8, scoped, tag = 'scoped memory for tpu_custom_call.1']
    #allocation7 [shape = 's32[2]{0}', space=sflag, size = 0x8, scoped, tag = 'scoped memory for tpu_custom_call.1']
    #allocation8 [shape = 'u8[49152]{0}', space=vmem, size = 0xc000, scoped, tag = 'input window, operand 1, single buffered']
    #allocation9 [shape = 's32[1]{0}', space=sflag, size = 0x4, scoped, tag = 'scoped memory for tpu_custom_call.1']
    #allocation10 [shape = 'u8[131072]{0}', space=vmem, size = 0x20000, scoped, tag = 'input window, operand 2, single buffered']
    #allocation11 [shape = 'u8[8192]{0}', space=vmem, size = 0x2000, scoped, tag = 'output window, operand 0']
    %9 = vsyncpa [#allocation6], 0
    %10 = vsyncpa [#allocation9], 0
    %11 = vsyncpa [#allocation7], 0
    %s12 = scalar_lea.sflag [#allocation7], 1
    %13 = vsyncpa %s12, 0
    loop: start=0, step=1, limit=5
    $region2: #{tpu_custom_call.1} parent=1 // loop_pre_header
      _
    $region3: #{tpu_custom_call.1} parent=1 // loop_header
      %s15 = sphi 0, %s19
      %p16 = scmp.ge.s32.totalorder %s15, 5
      %s22 = sphi 0, %s34
      %s23 = sphi 0, %s30
      %s24 = sphi 0, %s22
      %s25 = sphi 0, %s23
      %s26 = sphi 0, %s24
      %s27 = sphi 0, %s25
      %s37 = sphi 0, %s39
      %s40 = sphi 0, %s37
      %s41 = sphi 0, %s40
      %s57 = sphi 0, %s41
      %s61 = sphi 0, %s61
      %s63 = sphi 0, %s61
      %s64 = sphi 0, %s63
      %s78 = sphi 0, %s64
      %s82 = sphi 0, %s82
      %s84 = sphi 0, %s82
      %s85 = sphi 0, %s84
      %s99 = sphi 0, %s85
      %s103 = sphi 0, %s103
      %s105 = sphi 0, %s103
      %s106 = sphi 0, %s105
      %s120 = sphi 0, %s106
      %s130 = sphi 0, %s132
      %s133 = sphi 0, %s130
      %s134 = sphi 0, %s133
      %s150 = sphi 0, %s134
    $region4: #{tpu_custom_call.1} parent=1 // loop_header_branch
      %18 = sbr.rel (%p16) target = $region8
    $region5: #{tpu_custom_call.1} parent=1 // loop_body
      %s20 = ssub.s32 %s15, 1
      %s21 = ssub.s32 %s15, 2
      %s28 = sadd.s32 1, %s23
      %p29 = scmp.ge.s32.totalorder %s28, 1
      %s30 = scalar_select %p29, 0, %s28
      %s31 = sadd.s32 1, %s22
      %s32 = scalar_select %p29, %s31, %s22
      %p33 = scmp.ge.s32.totalorder %s32, 3
      %s34 = scalar_select %p33, 0, %s32
      %s35 = ssub.s32 %s23, %s30
      %p36 = scmp.eq.s32.totalorder %s35, 0
      %s38 = sadd.s32 %s37, 1
      %s39 = scalar_select %p36, %s37, %s38
      %p42 = pneg %p36
      %p43 = scmp.eq.s32.totalorder %s15, 2
      %p44 = por %p42, %p43
      %p45 = scmp.ne.s32.totalorder %s37, %s40
      %p46 = scmp.eq.s32.totalorder %s15, 0
      %p47 = por %p45, %p46
      %p48 = scmp.ne.s32.totalorder %s37, %s40
      %p49 = scmp.eq.s32.totalorder %s20, 2
      %p50 = por %p48, %p49
      %p51 = scmp.ne.s32.totalorder %s40, %s41
      %p52 = scmp.eq.s32.totalorder %s20, 0
      %p53 = por %p51, %p52
      %p54 = scmp.ne.s32.totalorder %s40, %s41
      %p55 = scmp.eq.s32.totalorder %s21, 2
      %p56 = por %p54, %p55
      %p58 = scmp.ne.s32.totalorder %s41, %s57
      %p59 = scmp.eq.s32.totalorder %s21, 0
      %p60 = por %p58, %p59
      %s62 = sadd.s32 %s61, 1
      %p65 = scmp.eq.s32.totalorder %s15, 2
      %p66 = scmp.ne.s32.totalorder %s61, %s63
      %p67 = scmp.eq.s32.totalorder %s15, 0
      %p68 = por %p66, %p67
      %p69 = scmp.ne.s32.totalorder %s61, %s63
      %p70 = scmp.eq.s32.totalorder %s20, 2
      %p71 = por %p69, %p70
      %p72 = scmp.ne.s32.totalorder %s63, %s64
      %p73 = scmp.eq.s32.totalorder %s20, 0
      %p74 = por %p72, %p73
      %p75 = scmp.ne.s32.totalorder %s63, %s64
      %p76 = scmp.eq.s32.totalorder %s21, 2
      %p77 = por %p75, %p76
      %p79 = scmp.ne.s32.totalorder %s64, %s78
      %p80 = scmp.eq.s32.totalorder %s21, 0
      %p81 = por %p79, %p80
      %s83 = sadd.s32 %s82, 1
      %p86 = scmp.eq.s32.totalorder %s15, 2
      %p87 = scmp.ne.s32.totalorder %s82, %s84
      %p88 = scmp.eq.s32.totalorder %s15, 0
      %p89 = por %p87, %p88
      %p90 = scmp.ne.s32.totalorder %s82, %s84
      %p91 = scmp.eq.s32.totalorder %s20, 2
      %p92 = por %p90, %p91
      %p93 = scmp.ne.s32.totalorder %s84, %s85
      %p94 = scmp.eq.s32.totalorder %s20, 0
      %p95 = por %p93, %p94
      %p96 = scmp.ne.s32.totalorder %s84, %s85
      %p97 = scmp.eq.s32.totalorder %s21, 2
      %p98 = por %p96, %p97
      %p100 = scmp.ne.s32.totalorder %s85, %s99
      %p101 = scmp.eq.s32.totalorder %s21, 0
      %p102 = por %p100, %p101
      %s104 = sadd.s32 %s103, 1
      %p107 = scmp.eq.s32.totalorder %s15, 2
      %p108 = scmp.ne.s32.totalorder %s103, %s105
      %p109 = scmp.eq.s32.totalorder %s15, 0
      %p110 = por %p108, %p109
      %p111 = scmp.ne.s32.totalorder %s103, %s105
      %p112 = scmp.eq.s32.totalorder %s20, 2
      %p113 = por %p111, %p112
      %p114 = scmp.ne.s32.totalorder %s105, %s106
      %p115 = scmp.eq.s32.totalorder %s20, 0
      %p116 = por %p114, %p115
      %p117 = scmp.ne.s32.totalorder %s105, %s106
      %p118 = scmp.eq.s32.totalorder %s21, 2
      %p119 = por %p117, %p118
      %p121 = scmp.ne.s32.totalorder %s106, %s120
      %p122 = scmp.eq.s32.totalorder %s21, 0
      %p123 = por %p121, %p122
      %p124 = scmp.eq.s32.totalorder %s22, 2
      %s125 = scalar_select %p124, %s23, 1
      %p126 = scmp.eq.s32.totalorder %s34, 2
      %s127 = scalar_select %p126, %s30, 1
      %s128 = ssub.s32 %s125, %s127
      %p129 = scmp.eq.s32.totalorder %s128, 0
      %s131 = sadd.s32 %s130, 1
      %s132 = scalar_select %p129, %s130, %s131
      %p135 = pneg %p129
      %p136 = scmp.eq.s32.totalorder %s15, 2
      %p137 = por %p135, %p136
      %p138 = scmp.ne.s32.totalorder %s130, %s133
      %p139 = scmp.eq.s32.totalorder %s15, 0
      %p140 = por %p138, %p139
      %p141 = scmp.ne.s32.totalorder %s130, %s133
      %p142 = scmp.eq.s32.totalorder %s20, 2
      %p143 = por %p141, %p142
      %p144 = scmp.ne.s32.totalorder %s133, %s134
      %p145 = scmp.eq.s32.totalorder %s20, 0
      %p146 = por %p144, %p145
      %p147 = scmp.ne.s32.totalorder %s133, %s134
      %p148 = scmp.eq.s32.totalorder %s21, 2
      %p149 = por %p147, %p148
      %p151 = scmp.ne.s32.totalorder %s134, %s150
      %p152 = scmp.eq.s32.totalorder %s21, 0
      %p153 = por %p151, %p152
      %p154 = scmp.le.s32.totalorder 1, %s15
      %p155 = scmp.lt.s32.totalorder %s15, 4
      %p156 = pnand %p154, %p155
      %p157 = pneg %p156
      // Predicated region
      $region9: #{tpu_custom_call.1} parent=5 // pred_check
        _
      $region10: #{tpu_custom_call.1} parent=5 // pred_check_branch
        %159 = sbr.rel (%p156) target = $region12
      $region11: #{tpu_custom_call.1} parent=5 // pred_region
        %s160 = ssub.s32 %s15, 1
        // Predicated region
        $region13: #{tpu_custom_call.1} parent=11 // pred_check
          %p161 = pneg %p53
        $region14: #{tpu_custom_call.1} parent=11 // pred_check_branch
          %163 = sbr.rel (%p161) target = $region16
        $region15: #{tpu_custom_call.1} parent=11 // pred_region
          %s165 = ssub.s32 128, 128
          %166 = vsyncadd [#allocation6], %s165
          %s167 = smul.addr %s25, 128
          %s168 = scalar_lea.hbm %s0, %s167
          %s170 = sshll.u32 [#allocation5], 4
          %s171 = int_to_ptr.vmem [resolvable:$true] %s170
          %173 = dma.hbm_to_vmem [thread:$0]  %s168, 128, %s171, [#allocation6]
        $region16: #{tpu_custom_call.1} parent=11 // pred_fallthru
          _
        // Predicated region
        $region17: #{tpu_custom_call.1} parent=11 // pred_check
          %p174 = pneg %p74
        $region18: #{tpu_custom_call.1} parent=11 // pred_check_branch
          %176 = sbr.rel (%p174) target = $region20
        $region19: #{tpu_custom_call.1} parent=11 // pred_region
          %s178 = ssub.s32 1536, 1536
          %179 = vsyncadd [#allocation9], %s178
          %s180 = sshll.u32 [#allocation8], 4
          %s181 = int_to_ptr.vmem [resolvable:$true] %s180
          %186 = dma.hbm_to_vmem [thread:$0]  %s1, 1536, %s181, [#allocation9], 512, 512, 32
        $region20: #{tpu_custom_call.1} parent=11 // pred_fallthru
          _
        // Predicated region
        $region21: #{tpu_custom_call.1} parent=11 // pred_check
          %p187 = pneg %p95
        $region22: #{tpu_custom_call.1} parent=11 // pred_check_branch
          %189 = sbr.rel (%p187) target = $region24
        $region23: #{tpu_custom_call.1} parent=11 // pred_region
          %s191 = ssub.s32 4096, 4096
          %192 = vsyncadd [#allocation9], %s191
          %s193 = sshll.u32 [#allocation10], 4
          %s194 = int_to_ptr.vmem [resolvable:$true] %s193
          %199 = dma.hbm_to_vmem [thread:$0]  %s2, 4096, %s194, [#allocation9], 64, 64, 4
        $region24: #{tpu_custom_call.1} parent=11 // pred_fallthru
          _
        // Predicated region
        $region25: #{tpu_custom_call.1} parent=11 // pred_check
          %p200 = pneg %p116
        $region26: #{tpu_custom_call.1} parent=11 // pred_check_branch
          %202 = sbr.rel (%p200) target = $region28
        $region27: #{tpu_custom_call.1} parent=11 // pred_region
          _
        $region28: #{tpu_custom_call.1} parent=11 // pred_fallthru
          _
      $region12: #{tpu_custom_call.1} parent=5 // pred_fallthru
        _
      %p203 = scmp.lt.s32.totalorder %s15, 3
      // Predicated region
      $region29: #{tpu_custom_call.1} parent=5 // pred_check
        %p204 = pneg %p203
      $region30: #{tpu_custom_call.1} parent=5 // pred_check_branch
        %206 = sbr.rel (%p204) target = $region32
      $region31: #{tpu_custom_call.1} parent=5 // pred_region
        _
      $region32: #{tpu_custom_call.1} parent=5 // pred_fallthru
        _
      %p207 = scmp.le.s32.totalorder 1, %s15
      %p208 = scmp.lt.s32.totalorder %s15, 4
      %p209 = pnand %p207, %p208
      %p210 = pneg %p209
      // Predicated region
      $region33: #{tpu_custom_call.1} parent=5 // pred_check
        _
      $region34: #{tpu_custom_call.1} parent=5 // pred_check_branch
        %212 = sbr.rel (%p209) target = $region36
      $region35: #{tpu_custom_call.1} parent=5 // pred_region
        %s213 = ssub.s32 %s15, 1
        // Predicated region
        $region37: #{tpu_custom_call.1} parent=35 // pred_check
          %p214 = pneg %p53
        $region38: #{tpu_custom_call.1} parent=35 // pred_check_branch
          %216 = sbr.rel (%p214) target = $region40
        $region39: #{tpu_custom_call.1} parent=35 // pred_region
          %217 = dma.done [#allocation6], 128
        $region40: #{tpu_custom_call.1} parent=35 // pred_fallthru
          _
        // Predicated region
        $region41: #{tpu_custom_call.1} parent=35 // pred_check
          %p218 = pneg %p74
        $region42: #{tpu_custom_call.1} parent=35 // pred_check_branch
          %220 = sbr.rel (%p218) target = $region44
        $region43: #{tpu_custom_call.1} parent=35 // pred_region
          %221 = dma.done [#allocation9], 1536
        $region44: #{tpu_custom_call.1} parent=35 // pred_fallthru
          _
        // Predicated region
        $region45: #{tpu_custom_call.1} parent=35 // pred_check
          %p222 = pneg %p95
        $region46: #{tpu_custom_call.1} parent=35 // pred_check_branch
          %224 = sbr.rel (%p222) target = $region48
        $region47: #{tpu_custom_call.1} parent=35 // pred_region
          %225 = dma.done [#allocation9], 4096
        $region48: #{tpu_custom_call.1} parent=35 // pred_fallthru
          _
        %p226 = pneg %p53
        %p227 = pneg %p50
        %p228 = pneg %p74
        %p229 = pneg %p71
        %p230 = pneg %p95
        %p231 = pneg %p92
        %p232 = pneg %p116
        %p233 = pneg %p113
        %p234 = pneg %p146
        %p235 = pneg %p143
        %s236 = sand.u32 %s133, 1
        %s237 = scalar_lea.sflag [#allocation7], %s236
        %s238 = sand.u32 %s133, 1
        %s239 = smul.addr %s238, 8
        %s240 = scalar_lea.vmem [#allocation11], %s239
        %p241 = scmp.eq.s32.totalorder %s24, 2
        %s242 = scalar_select %p241, %s25, 1
        %p244 = scmp.eq.s32.totalorder %s24, 0
        %p245 = scmp.eq.s32.totalorder %s25, 0
        %p246 = pnand %p244, %p245
        %p247 = pneg %p246
        // Predicated region
        $region49: #{tpu_custom_call.1} parent=35 // pred_check
          _
        $region50: #{tpu_custom_call.1} parent=35 // pred_check_branch
          %249 = sbr.rel (%p246) target = $region52
        $region51: #{tpu_custom_call.1} parent=35 // pred_region
          %v250 = vlaneseq
          %vm251 = vcmp.ge.s32.totalorder %v250, 0
          %vm252 = vcmp.lt.s32.totalorder %v250, 512
          %vm253 = vmand %vm251, %vm252
          %254 = vst.msk [vmem:[#allocation2] sm:$0xf] %vm253, 0.0
          %255 = vst [vmem:[#allocation3] sm:$0xff] 0.0
          %256 = vst [vmem:[#allocation3 + $0x8] sm:$0xff] 0.0
          %257 = vst [vmem:[#allocation3 + $0x10] sm:$0xff] 0.0
          %258 = vst [vmem:[#allocation3 + $0x18] sm:$0xff] 0.0
          %259 = vst [vmem:[#allocation3 + $0x20] sm:$0xff] 0.0
          %260 = vst [vmem:[#allocation3 + $0x28] sm:$0xff] 0.0
          %261 = vst [vmem:[#allocation3 + $0x30] sm:$0xff] 0.0
          %262 = vst [vmem:[#allocation3 + $0x38] sm:$0xff] 0.0
          %263 = vst [vmem:[#allocation3 + $0x40] sm:$0xff] 0.0
          %264 = vst [vmem:[#allocation3 + $0x48] sm:$0xff] 0.0
          %265 = vst [vmem:[#allocation3 + $0x50] sm:$0xff] 0.0
          %266 = vst [vmem:[#allocation3 + $0x58] sm:$0xff] 0.0
          %267 = vst [vmem:[#allocation3 + $0x60] sm:$0xff] 0.0
          %268 = vst [vmem:[#allocation3 + $0x68] sm:$0xff] 0.0
          %269 = vst [vmem:[#allocation3 + $0x70] sm:$0xff] 0.0
          %270 = vst [vmem:[#allocation3 + $0x78] sm:$0xff] 0.0
          %271 = vst [vmem:[#allocation3 + $0x80] sm:$0xff] 0.0
          %272 = vst [vmem:[#allocation3 + $0x88] sm:$0xff] 0.0
          %273 = vst [vmem:[#allocation3 + $0x90] sm:$0xff] 0.0
          %274 = vst [vmem:[#allocation3 + $0x98] sm:$0xff] 0.0
          %275 = vst [vmem:[#allocation3 + $0xa0] sm:$0xff] 0.0
          %276 = vst [vmem:[#allocation3 + $0xa8] sm:$0xff] 0.0
          %277 = vst [vmem:[#allocation3 + $0xb0] sm:$0xff] 0.0
          %278 = vst [vmem:[#allocation3 + $0xb8] sm:$0xff] 0.0
          %279 = vst [vmem:[#allocation3 + $0xc0] sm:$0xff] 0.0
          %280 = vst [vmem:[#allocation3 + $0xc8] sm:$0xff] 0.0
          %281 = vst [vmem:[#allocation3 + $0xd0] sm:$0xff] 0.0
          %282 = vst [vmem:[#allocation3 + $0xd8] sm:$0xff] 0.0
          %283 = vst [vmem:[#allocation3 + $0xe0] sm:$0xff] 0.0
          %284 = vst [vmem:[#allocation3 + $0xe8] sm:$0xff] 0.0
          %285 = vst [vmem:[#allocation3 + $0xf0] sm:$0xff] 0.0
          %286 = vst [vmem:[#allocation3 + $0xf8] sm:$0xff] 0.0
          %287 = vst [vmem:[#allocation3 + $0x100] sm:$0xff] 0.0
          %288 = vst [vmem:[#allocation3 + $0x108] sm:$0xff] 0.0
          %289 = vst [vmem:[#allocation3 + $0x110] sm:$0xff] 0.0
          %290 = vst [vmem:[#allocation3 + $0x118] sm:$0xff] 0.0
          %291 = vst [vmem:[#allocation3 + $0x120] sm:$0xff] 0.0
          %292 = vst [vmem:[#allocation3 + $0x128] sm:$0xff] 0.0
          %293 = vst [vmem:[#allocation3 + $0x130] sm:$0xff] 0.0
          %294 = vst [vmem:[#allocation3 + $0x138] sm:$0xff] 0.0
          %295 = vst [vmem:[#allocation3 + $0x140] sm:$0xff] 0.0
          %296 = vst [vmem:[#allocation3 + $0x148] sm:$0xff] 0.0
          %297 = vst [vmem:[#allocation3 + $0x150] sm:$0xff] 0.0
          %298 = vst [vmem:[#allocation3 + $0x158] sm:$0xff] 0.0
          %299 = vst [vmem:[#allocation3 + $0x160] sm:$0xff] 0.0
          %300 = vst [vmem:[#allocation3 + $0x168] sm:$0xff] 0.0
          %301 = vst [vmem:[#allocation3 + $0x170] sm:$0xff] 0.0
          %302 = vst [vmem:[#allocation3 + $0x178] sm:$0xff] 0.0
          %303 = vst [vmem:[#allocation3 + $0x180] sm:$0xff] 0.0
          %304 = vst [vmem:[#allocation3 + $0x188] sm:$0xff] 0.0
          %305 = vst [vmem:[#allocation3 + $0x190] sm:$0xff] 0.0
          %306 = vst [vmem:[#allocation3 + $0x198] sm:$0xff] 0.0
          %307 = vst [vmem:[#allocation3 + $0x1a0] sm:$0xff] 0.0
          %308 = vst [vmem:[#allocation3 + $0x1a8] sm:$0xff] 0.0
          %309 = vst [vmem:[#allocation3 + $0x1b0] sm:$0xff] 0.0
          %310 = vst [vmem:[#allocation3 + $0x1b8] sm:$0xff] 0.0
          %311 = vst [vmem:[#allocation3 + $0x1c0] sm:$0xff] 0.0
          %312 = vst [vmem:[#allocation3 + $0x1c8] sm:$0xff] 0.0
          %313 = vst [vmem:[#allocation3 + $0x1d0] sm:$0xff] 0.0
          %314 = vst [vmem:[#allocation3 + $0x1d8] sm:$0xff] 0.0
          %315 = vst [vmem:[#allocation3 + $0x1e0] sm:$0xff] 0.0
          %316 = vst [vmem:[#allocation3 + $0x1e8] sm:$0xff] 0.0
          %317 = vst [vmem:[#allocation3 + $0x1f0] sm:$0xff] 0.0
          %318 = vst [vmem:[#allocation3 + $0x1f8] sm:$0xff] 0.0
        $region52: #{tpu_custom_call.1} parent=35 // pred_fallthru
          _
        %v319 = vld [vmem:[#allocation5] sm:$0xff]
        %v320 = vxor.u32 %v319, 2147483648
        %v321 = vmul.f32 %v320, 1.442695
        %v322 = vpow.pop %v321
        %v323 = vadd.f32 %v322, 1.0
        %v324 = vrcp.pop %v323
        %v325 = vmul.f32 1.0, %v324
        %v326 = vmul.f32 %v325, 0.4
        %v327 = vld [vmem:[#allocation8] sm:$0xff]
        %v328 = vld [vmem:[#allocation8 + $0x8] sm:$0xff]
        %v329 = vld [vmem:[#allocation8 + $0x10] sm:$0xff]
        %v330 = vld [vmem:[#allocation8 + $0x18] sm:$0xff]
        %vm331 = vcmask 64512
        %v333 = vsel %vm331, %v326, 0
        %335 = vmatprep.subr.mxu0 %v328
        %336 = vmatpush1.msra.mxu0 %v327
        %337 = vmatprep.subr.mxu0 0.0
        %338 = vmatpush1.msra.mxu0 0.0
        %339 = vmatprep.subr.mxu0 0.0
        %340 = vmatpush1.msra.mxu0 0.0
        %341 = vmatprep.subr.mxu0 0.0
        %342 = vmatpush1.msra.mxu0 0.0
        %343 = vmatprep.subr.mxu0 0.0
        %344 = vmatpush1.msra.mxu0 0.0
        %345 = vmatprep.subr.mxu0 0.0
        %346 = vmatpush1.msra.mxu0 0.0
        %347 = vmatprep.subr.mxu0 0.0
        %348 = vmatpush1.msra.mxu0 0.0
        %349 = vmatprep.subr.mxu0 0.0
        %350 = vmatpush1.msra.mxu0 0.0
        %351 = vmatprep.subr.mxu0 0.0
        %352 = vmatpush1.msra.mxu0 0.0
        %353 = vmatprep.subr.mxu0 0.0
        %354 = vmatpush1.msra.mxu0 0.0
        %355 = vmatprep.subr.mxu0 0.0
        %356 = vmatpush1.msra.mxu0 0.0
        %357 = vmatprep.subr.mxu0 0.0
        %358 = vmatpush1.msra.mxu0 0.0
        %359 = vmatprep.subr.mxu0 0.0
        %360 = vmatpush1.msra.mxu0 0.0
        %361 = vmatprep.subr.mxu0 0.0
        %362 = vmatpush1.msra.mxu0 0.0
        %363 = vmatprep.subr.mxu0 0.0
        %364 = vmatpush1.msra.mxu0 0.0
        %365 = vmatprep.subr.mxu0 0.0
        %366 = vmatpush1.msra.mxu0 0.0
        %367 = vmatprep.subr.mxu0 0.0
        %368 = vmatpush1.msra.mxu0 0.0
        %369 = vmatprep.subr.mxu0 0.0
        %370 = vmatpush1.msra.mxu0 0.0
        %371 = vmatprep.subr.mxu0 0.0
        %372 = vmatpush1.msra.mxu0 0.0
        %373 = vmatprep.subr.mxu0 0.0
        %374 = vmatpush1.msra.mxu0 0.0
        %375 = vmatprep.subr.mxu0 0.0
        %376 = vmatpush1.msra.mxu0 0.0
        %377 = vmatprep.subr.mxu0 0.0
        %378 = vmatpush1.msra.mxu0 0.0
        %379 = vmatprep.subr.mxu0 0.0
        %380 = vmatpush1.msra.mxu0 0.0
        %381 = vmatprep.subr.mxu0 0.0
        %382 = vmatpush1.msra.mxu0 0.0
        %383 = vmatprep.subr.mxu0 0.0
        %384 = vmatpush1.msra.mxu0 0.0
        %385 = vmatprep.subr.mxu0 0.0
        %386 = vmatpush1.msra.mxu0 0.0
        %387 = vmatprep.subr.mxu0 0.0
        %388 = vmatpush1.msra.mxu0 0.0
        %389 = vmatprep.subr.mxu0 0.0
        %390 = vmatpush1.msra.mxu0 0.0
        %391 = vmatprep.subr.mxu0 0.0
        %392 = vmatpush1.msra.mxu0 0.0
        %393 = vmatprep.subr.mxu0 0.0
        %394 = vmatpush1.msra.mxu0 0.0
        %395 = vmatprep.subr.mxu0 0.0
        %396 = vmatpush1.msra.mxu0 0.0
        %397 = vmatprep.subr.mxu0 0.0
        %398 = vmatpush1.msra.mxu0 0.0
        %399 = vmatprep.mubr.f32.mxu0 0.0
        %400 = vmatmul.mubr.f32.gmra.mrb[0].mxu0 %v333
        %v401 = vpop.f32.mrb[0].mxu0
        %v402 = vadd.f32 0.0, %v401
        %v403 = vpop.f32.mrb[0].mxu0
        %v404 = vadd.f32 0.0, %v403
        %405 = vdwg.mxu0
        %406 = vmatprep.subr.mxu0 %v330
        %407 = vmatpush1.msra.mxu0 %v329
        %408 = vmatprep.subr.mxu0 0.0
        %409 = vmatpush1.msra.mxu0 0.0
        %410 = vmatprep.subr.mxu0 0.0
        %411 = vmatpush1.msra.mxu0 0.0
        %412 = vmatprep.subr.mxu0 0.0
        %413 = vmatpush1.msra.mxu0 0.0
        %414 = vmatprep.subr.mxu0 0.0
        %415 = vmatpush1.msra.mxu0 0.0
        %416 = vmatprep.subr.mxu0 0.0
        %417 = vmatpush1.msra.mxu0 0.0
        %418 = vmatprep.subr.mxu0 0.0
        %419 = vmatpush1.msra.mxu0 0.0
        %420 = vmatprep.subr.mxu0 0.0
        %421 = vmatpush1.msra.mxu0 0.0
        %422 = vmatprep.subr.mxu0 0.0
        %423 = vmatpush1.msra.mxu0 0.0
        %424 = vmatprep.subr.mxu0 0.0
        %425 = vmatpush1.msra.mxu0 0.0
        %426 = vmatprep.subr.mxu0 0.0
        %427 = vmatpush1.msra.mxu0 0.0
        %428 = vmatprep.subr.mxu0 0.0
        %429 = vmatpush1.msra.mxu0 0.0
        %430 = vmatprep.subr.mxu0 0.0
        %431 = vmatpush1.msra.mxu0 0.0
        %432 = vmatprep.subr.mxu0 0.0
        %433 = vmatpush1.msra.mxu0 0.0
        %434 = vmatprep.subr.mxu0 0.0
        %435 = vmatpush1.msra.mxu0 0.0
        %436 = vmatprep.subr.mxu0 0.0
        %437 = vmatpush1.msra.mxu0 0.0
        %438 = vmatprep.subr.mxu0 0.0
        %439 = vmatpush1.msra.mxu0 0.0
        %440 = vmatprep.subr.mxu0 0.0
        %441 = vmatpush1.msra.mxu0 0.0
        %442 = vmatprep.subr.mxu0 0.0
        %443 = vmatpush1.msra.mxu0 0.0
        %444 = vmatprep.subr.mxu0 0.0
        %445 = vmatpush1.msra.mxu0 0.0
        %446 = vmatprep.subr.mxu0 0.0
        %447 = vmatpush1.msra.mxu0 0.0
        %448 = vmatprep.subr.mxu0 0.0
        %449 = vmatpush1.msra.mxu0 0.0
        %450 = vmatprep.subr.mxu0 0.0
        %451 = vmatpush1.msra.mxu0 0.0
        %452 = vmatprep.subr.mxu0 0.0
        %453 = vmatpush1.msra.mxu0 0.0
        %454 = vmatprep.subr.mxu0 0.0
        %455 = vmatpush1.msra.mxu0 0.0
        %456 = vmatprep.subr.mxu0 0.0
        %457 = vmatpush1.msra.mxu0 0.0
        %458 = vmatprep.subr.mxu0 0.0
        %459 = vmatpush1.msra.mxu0 0.0
        %460 = vmatprep.subr.mxu0 0.0
        %461 = vmatpush1.msra.mxu0 0.0
        %462 = vmatprep.subr.mxu0 0.0
        %463 = vmatpush1.msra.mxu0 0.0
        %464 = vmatprep.subr.mxu0 0.0
        %465 = vmatpush1.msra.mxu0 0.0
        %466 = vmatprep.subr.mxu0 0.0
        %467 = vmatpush1.msra.mxu0 0.0
        %468 = vmatprep.subr.mxu0 0.0
        %469 = vmatpush1.msra.mxu0 0.0
        %470 = vmatprep.mubr.f32.mxu0 0.0
        %471 = vmatmul.mubr.f32.gmra.mrb[0].mxu0 %v333
        %v472 = vpop.f32.mrb[0].mxu0
        %v473 = vadd.f32 0.0, %v472
        %v474 = vpop.f32.mrb[0].mxu0
        %v475 = vadd.f32 0.0, %v474
        %476 = vdwg.mxu0
        %v477 = vld [vmem:[#allocation8 + $0x20] sm:$0xff]
        %v478 = vld [vmem:[#allocation8 + $0x28] sm:$0xff]
        %v479 = vld [vmem:[#allocation8 + $0x30] sm:$0xff]
        %v480 = vld [vmem:[#allocation8 + $0x38] sm:$0xff]
        %482 = vrot.lane.b32.xlu0 %v325, 120
        %v483 = vpop.permute.xlu0 %482
        %v484 = vsel %vm331, %v483, 0
        %486 = vmatprep.subr.mxu0 %v478
        %487 = vmatpush1.msra.mxu0 %v477
        %488 = vmatprep.subr.mxu0 0.0
        %489 = vmatpush1.msra.mxu0 0.0
        %490 = vmatprep.subr.mxu0 0.0
        %491 = vmatpush1.msra.mxu0 0.0
        %492 = vmatprep.subr.mxu0 0.0
        %493 = vmatpush1.msra.mxu0 0.0
        %494 = vmatprep.subr.mxu0 0.0
        %495 = vmatpush1.msra.mxu0 0.0
        %496 = vmatprep.subr.mxu0 0.0
        %497 = vmatpush1.msra.mxu0 0.0
        %498 = vmatprep.subr.mxu0 0.0
        %499 = vmatpush1.msra.mxu0 0.0
        %500 = vmatprep.subr.mxu0 0.0
        %501 = vmatpush1.msra.mxu0 0.0
        %502 = vmatprep.subr.mxu0 0.0
        %503 = vmatpush1.msra.mxu0 0.0
        %504 = vmatprep.subr.mxu0 0.0
        %505 = vmatpush1.msra.mxu0 0.0
        %506 = vmatprep.subr.mxu0 0.0
        %507 = vmatpush1.msra.mxu0 0.0
        %508 = vmatprep.subr.mxu0 0.0
        %509 = vmatpush1.msra.mxu0 0.0
        %510 = vmatprep.subr.mxu0 0.0
        %511 = vmatpush1.msra.mxu0 0.0
        %512 = vmatprep.subr.mxu0 0.0
        %513 = vmatpush1.msra.mxu0 0.0
        %514 = vmatprep.subr.mxu0 0.0
        %515 = vmatpush1.msra.mxu0 0.0
        %516 = vmatprep.subr.mxu0 0.0
        %517 = vmatpush1.msra.mxu0 0.0
        %518 = vmatprep.subr.mxu0 0.0
        %519 = vmatpush1.msra.mxu0 0.0
        %520 = vmatprep.subr.mxu0 0.0
        %521 = vmatpush1.msra.mxu0 0.0
        %522 = vmatprep.subr.mxu0 0.0
        %523 = vmatpush1.msra.mxu0 0.0
        %524 = vmatprep.subr.mxu0 0.0
        %525 = vmatpush1.msra.mxu0 0.0
        %526 = vmatprep.subr.mxu0 0.0
        %527 = vmatpush1.msra.mxu0 0.0
        %528 = vmatprep.subr.mxu0 0.0
        %529 = vmatpush1.msra.mxu0 0.0
        %530 = vmatprep.subr.mxu0 0.0
        %531 = vmatpush1.msra.mxu0 0.0
        %532 = vmatprep.subr.mxu0 0.0
        %533 = vmatpush1.msra.mxu0 0.0
        %534 = vmatprep.subr.mxu0 0.0
        %535 = vmatpush1.msra.mxu0 0.0
        %536 = vmatprep.subr.mxu0 0.0
        %537 = vmatpush1.msra.mxu0 0.0
        %538 = vmatprep.subr.mxu0 0.0
        %539 = vmatpush1.msra.mxu0 0.0
        %540 = vmatprep.subr.mxu0 0.0
        %541 = vmatpush1.msra.mxu0 0.0
        %542 = vmatprep.subr.mxu0 0.0
        %543 = vmatpush1.msra.mxu0 0.0
        %544 = vmatprep.subr.mxu0 0.0
        %545 = vmatpush1.msra.mxu0 0.0
        %546 = vmatprep.subr.mxu0 0.0
        %547 = vmatpush1.msra.mxu0 0.0
        %548 = vmatprep.subr.mxu0 0.0
        %549 = vmatpush1.msra.mxu0 0.0
        %550 = vmatprep.mubr.f32.mxu0 0.0
        %551 = vmatmul.mubr.f32.gmra.mrb[0].mxu0 %v484
        %v552 = vpop.f32.mrb[0].mxu0
        %v553 = vadd.f32 0.0, %v552
        %v554 = vpop.f32.mrb[0].mxu0
        %v555 = vadd.f32 0.0, %v554
        %556 = vdwg.mxu0
        %557 = vmatprep.subr.mxu0 %v480
        %558 = vmatpush1.msra.mxu0 %v479
        %559 = vmatprep.subr.mxu0 0.0
        %560 = vmatpush1.msra.mxu0 0.0
        %561 = vmatprep.subr.mxu0 0.0
        %562 = vmatpush1.msra.mxu0 0.0
        %563 = vmatprep.subr.mxu0 0.0
        %564 = vmatpush1.msra.mxu0 0.0
        %565 = vmatprep.subr.mxu0 0.0
        %566 = vmatpush1.msra.mxu0 0.0
        %567 = vmatprep.subr.mxu0 0.0
        %568 = vmatpush1.msra.mxu0 0.0
        %569 = vmatprep.subr.mxu0 0.0
        %570 = vmatpush1.msra.mxu0 0.0
        %571 = vmatprep.subr.mxu0 0.0
        %572 = vmatpush1.msra.mxu0 0.0
        %573 = vmatprep.subr.mxu0 0.0
        %574 = vmatpush1.msra.mxu0 0.0
        %575 = vmatprep.subr.mxu0 0.0
        %576 = vmatpush1.msra.mxu0 0.0
        %577 = vmatprep.subr.mxu0 0.0
        %578 = vmatpush1.msra.mxu0 0.0
        %579 = vmatprep.subr.mxu0 0.0
        %580 = vmatpush1.msra.mxu0 0.0
        %581 = vmatprep.subr.mxu0 0.0
        %582 = vmatpush1.msra.mxu0 0.0
        %583 = vmatprep.subr.mxu0 0.0
        %584 = vmatpush1.msra.mxu0 0.0
        %585 = vmatprep.subr.mxu0 0.0
        %586 = vmatpush1.msra.mxu0 0.0
        %587 = vmatprep.subr.mxu0 0.0
        %588 = vmatpush1.msra.mxu0 0.0
        %589 = vmatprep.subr.mxu0 0.0
        %590 = vmatpush1.msra.mxu0 0.0
        %591 = vmatprep.subr.mxu0 0.0
        %592 = vmatpush1.msra.mxu0 0.0
        %593 = vmatprep.subr.mxu0 0.0
        %594 = vmatpush1.msra.mxu0 0.0
        %595 = vmatprep.subr.mxu0 0.0
        %596 = vmatpush1.msra.mxu0 0.0
        %597 = vmatprep.subr.mxu0 0.0
        %598 = vmatpush1.msra.mxu0 0.0
        %599 = vmatprep.subr.mxu0 0.0
        %600 = vmatpush1.msra.mxu0 0.0
        %601 = vmatprep.subr.mxu0 0.0
        %602 = vmatpush1.msra.mxu0 0.0
        %603 = vmatprep.subr.mxu0 0.0
        %604 = vmatpush1.msra.mxu0 0.0
        %605 = vmatprep.subr.mxu0 0.0
        %606 = vmatpush1.msra.mxu0 0.0
        %607 = vmatprep.subr.mxu0 0.0
        %608 = vmatpush1.msra.mxu0 0.0
        %609 = vmatprep.subr.mxu0 0.0
        %610 = vmatpush1.msra.mxu0 0.0
        %611 = vmatprep.subr.mxu0 0.0
        %612 = vmatpush1.msra.mxu0 0.0
        %613 = vmatprep.subr.mxu0 0.0
        %614 = vmatpush1.msra.mxu0 0.0
        %615 = vmatprep.subr.mxu0 0.0
        %616 = vmatpush1.msra.mxu0 0.0
        %617 = vmatprep.subr.mxu0 0.0
        %618 = vmatpush1.msra.mxu0 0.0
        %619 = vmatprep.subr.mxu0 0.0
        %620 = vmatpush1.msra.mxu0 0.0
        %621 = vmatprep.mubr.f32.mxu0 0.0
        %622 = vmatmul.mubr.f32.gmra.mrb[0].mxu0 %v484
        %v623 = vpop.f32.mrb[0].mxu0
        %v624 = vadd.f32 0.0, %v623
        %v625 = vpop.f32.mrb[0].mxu0
        %v626 = vadd.f32 0.0, %v625
        %627 = vdwg.mxu0
        %v628 = vld [vmem:[#allocation8 + $0x40] sm:$0xff]
        %v629 = vld [vmem:[#allocation8 + $0x48] sm:$0xff]
        %v630 = vld [vmem:[#allocation8 + $0x50] sm:$0xff]
        %v631 = vld [vmem:[#allocation8 + $0x58] sm:$0xff]
        %632 = vrot.lane.b32.xlu0 %v325, 112
        %v633 = vpop.permute.xlu0 %632
        %v634 = vsel %vm331, %v633, 0
        %636 = vmatprep.subr.mxu0 %v629
        %637 = vmatpush1.msra.mxu0 %v628
        %638 = vmatprep.subr.mxu0 0.0
        %639 = vmatpush1.msra.mxu0 0.0
        %640 = vmatprep.subr.mxu0 0.0
        %641 = vmatpush1.msra.mxu0 0.0
        %642 = vmatprep.subr.mxu0 0.0
        %643 = vmatpush1.msra.mxu0 0.0
        %644 = vmatprep.subr.mxu0 0.0
        %645 = vmatpush1.msra.mxu0 0.0
        %646 = vmatprep.subr.mxu0 0.0
        %647 = vmatpush1.msra.mxu0 0.0
        %648 = vmatprep.subr.mxu0 0.0
        %649 = vmatpush1.msra.mxu0 0.0
        %650 = vmatprep.subr.mxu0 0.0
        %651 = vmatpush1.msra.mxu0 0.0
        %652 = vmatprep.subr.mxu0 0.0
        %653 = vmatpush1.msra.mxu0 0.0
        %654 = vmatprep.subr.mxu0 0.0
        %655 = vmatpush1.msra.mxu0 0.0
        %656 = vmatprep.subr.mxu0 0.0
        %657 = vmatpush1.msra.mxu0 0.0
        %658 = vmatprep.subr.mxu0 0.0
        %659 = vmatpush1.msra.mxu0 0.0
        %660 = vmatprep.subr.mxu0 0.0
        %661 = vmatpush1.msra.mxu0 0.0
        %662 = vmatprep.subr.mxu0 0.0
        %663 = vmatpush1.msra.mxu0 0.0
        %664 = vmatprep.subr.mxu0 0.0
        %665 = vmatpush1.msra.mxu0 0.0
        %666 = vmatprep.subr.mxu0 0.0
        %667 = vmatpush1.msra.mxu0 0.0
        %668 = vmatprep.subr.mxu0 0.0
        %669 = vmatpush1.msra.mxu0 0.0
        %670 = vmatprep.subr.mxu0 0.0
        %671 = vmatpush1.msra.mxu0 0.0
        %672 = vmatprep.subr.mxu0 0.0
        %673 = vmatpush1.msra.mxu0 0.0
        %674 = vmatprep.subr.mxu0 0.0
        %675 = vmatpush1.msra.mxu0 0.0
        %676 = vmatprep.subr.mxu0 0.0
        %677 = vmatpush1.msra.mxu0 0.0
        %678 = vmatprep.subr.mxu0 0.0
        %679 = vmatpush1.msra.mxu0 0.0
        %680 = vmatprep.subr.mxu0 0.0
        %681 = vmatpush1.msra.mxu0 0.0
        %682 = vmatprep.subr.mxu0 0.0
        %683 = vmatpush1.msra.mxu0 0.0
        %684 = vmatprep.subr.mxu0 0.0
        %685 = vmatpush1.msra.mxu0 0.0
        %686 = vmatprep.subr.mxu0 0.0
        %687 = vmatpush1.msra.mxu0 0.0
        %688 = vmatprep.subr.mxu0 0.0
        %689 = vmatpush1.msra.mxu0 0.0
        %690 = vmatprep.subr.mxu0 0.0
        %691 = vmatpush1.msra.mxu0 0.0
        %692 = vmatprep.subr.mxu0 0.0
        %693 = vmatpush1.msra.mxu0 0.0
        %694 = vmatprep.subr.mxu0 0.0
        %695 = vmatpush1.msra.mxu0 0.0
        %696 = vmatprep.subr.mxu0 0.0
        %697 = vmatpush1.msra.mxu0 0.0
        %698 = vmatprep.subr.mxu0 0.0
        %699 = vmatpush1.msra.mxu0 0.0
        %700 = vmatprep.mubr.f32.mxu0 0.0
        %701 = vmatmul.mubr.f32.gmra.mrb[0].mxu0 %v634
        %v702 = vpop.f32.mrb[0].mxu0
        %v703 = vadd.f32 0.0, %v702
        %v704 = vpop.f32.mrb[0].mxu0
        %v705 = vadd.f32 0.0, %v704
        %706 = vdwg.mxu0
        %707 = vmatprep.subr.mxu0 %v631
        %708 = vmatpush1.msra.mxu0 %v630
        %709 = vmatprep.subr.mxu0 0.0
        %710 = vmatpush1.msra.mxu0 0.0
        %711 = vmatprep.subr.mxu0 0.0
        %712 = vmatpush1.msra.mxu0 0.0
        %713 = vmatprep.subr.mxu0 0.0
        %714 = vmatpush1.msra.mxu0 0.0
        %715 = vmatprep.subr.mxu0 0.0
        %716 = vmatpush1.msra.mxu0 0.0
        %717 = vmatprep.subr.mxu0 0.0
        %718 = vmatpush1.msra.mxu0 0.0
        %719 = vmatprep.subr.mxu0 0.0
        %720 = vmatpush1.msra.mxu0 0.0
        %721 = vmatprep.subr.mxu0 0.0
        %722 = vmatpush1.msra.mxu0 0.0
        %723 = vmatprep.subr.mxu0 0.0
        %724 = vmatpush1.msra.mxu0 0.0
        %725 = vmatprep.subr.mxu0 0.0
        %726 = vmatpush1.msra.mxu0 0.0
        %727 = vmatprep.subr.mxu0 0.0
        %728 = vmatpush1.msra.mxu0 0.0
        %729 = vmatprep.subr.mxu0 0.0
        %730 = vmatpush1.msra.mxu0 0.0
        %731 = vmatprep.subr.mxu0 0.0
        %732 = vmatpush1.msra.mxu0 0.0
        %733 = vmatprep.subr.mxu0 0.0
        %734 = vmatpush1.msra.mxu0 0.0
        %735 = vmatprep.subr.mxu0 0.0
        %736 = vmatpush1.msra.mxu0 0.0
        %737 = vmatprep.subr.mxu0 0.0
        %738 = vmatpush1.msra.mxu0 0.0
        %739 = vmatprep.subr.mxu0 0.0
        %740 = vmatpush1.msra.mxu0 0.0
        %741 = vmatprep.subr.mxu0 0.0
        %742 = vmatpush1.msra.mxu0 0.0
        %743 = vmatprep.subr.mxu0 0.0
        %744 = vmatpush1.msra.mxu0 0.0
        %745 = vmatprep.subr.mxu0 0.0
        %746 = vmatpush1.msra.mxu0 0.0
        %747 = vmatprep.subr.mxu0 0.0
        %748 = vmatpush1.msra.mxu0 0.0
        %749 = vmatprep.subr.mxu0 0.0
        %750 = vmatpush1.msra.mxu0 0.0
        %751 = vmatprep.subr.mxu0 0.0
        %752 = vmatpush1.msra.mxu0 0.0
        %753 = vmatprep.subr.mxu0 0.0
        %754 = vmatpush1.msra.mxu0 0.0
        %755 = vmatprep.subr.mxu0 0.0
        %756 = vmatpush1.msra.mxu0 0.0
        %757 = vmatprep.subr.mxu0 0.0
        %758 = vmatpush1.msra.mxu0 0.0
        %759 = vmatprep.subr.mxu0 0.0
        %760 = vmatpush1.msra.mxu0 0.0
        %761 = vmatprep.subr.mxu0 0.0
        %762 = vmatpush1.msra.mxu0 0.0
        %763 = vmatprep.subr.mxu0 0.0
        %764 = vmatpush1.msra.mxu0 0.0
        %765 = vmatprep.subr.mxu0 0.0
        %766 = vmatpush1.msra.mxu0 0.0
        %767 = vmatprep.subr.mxu0 0.0
        %768 = vmatpush1.msra.mxu0 0.0
        %769 = vmatprep.subr.mxu0 0.0
        %770 = vmatpush1.msra.mxu0 0.0
        %771 = vmatprep.mubr.f32.mxu0 0.0
        %772 = vmatmul.mubr.f32.gmra.mrb[0].mxu0 %v634
        %v773 = vpop.f32.mrb[0].mxu0
        %v774 = vadd.f32 0.0, %v773
        %v775 = vpop.f32.mrb[0].mxu0
        %v776 = vadd.f32 0.0, %v775
        %777 = vdwg.mxu0
        %v778 = vmul.f32 %v402, %v553
        %v779 = vmul.f32 %v404, %v555
        %v780 = vmul.f32 %v473, %v624
        %v781 = vmul.f32 %v475, %v626
        %v782 = vmul.f32 %v778, %v703
        %v783 = vmul.f32 %v779, %v705
        %v784 = vmul.f32 %v780, %v774
        %v785 = vmul.f32 %v781, %v776
        %v786 = vmul.f32 %v782, %v782
        %v787 = vmul.f32 %v783, %v783
        %v788 = vmul.f32 %v784, %v784
        %v789 = vmul.f32 %v785, %v785
        %v790 = vadd.f32 %v786, %v787
        %v791 = vadd.f32 %v790, %v788
        %v792 = vadd.f32 %v791, %v789
        %793 = vadd.xlane.f32.xlu0 %v792
        %v794 = vpop.xlane.xlu0 %793
        %v795 = vadd.f32 %v794, 1e-12
        %v796 = vrsqrt.pop %v795
        %v797 = vmul.f32 %v782, %v796
        %v798 = vmul.f32 %v783, %v796
        %v799 = vmul.f32 %v784, %v796
        %v800 = vmul.f32 %v785, %v796
        // Predicated region
        $region53: #{tpu_custom_call.1} parent=35 // pred_check
          %p801 = pneg %p244
        $region54: #{tpu_custom_call.1} parent=35 // pred_check_branch
          %803 = sbr.rel (%p801) target = $region56
        $region55: #{tpu_custom_call.1} parent=35 // pred_region
          %v804 = vld [vmem:[#allocation2] sm:$0xf]
          %v805 = vrot.slane %v797, 4
          %v806 = vadd.f32 %v797, %v805
          %v807 = vrot.slane %v806, 2
          %v808 = vadd.f32 %v806, %v807
          %v809 = vrot.slane %v808, 1
          %v810 = vadd.f32 %v808, %v809
          %v811 = vrot.slane %v798, 4
          %v812 = vadd.f32 %v798, %v811
          %v813 = vrot.slane %v812, 2
          %v814 = vadd.f32 %v812, %v813
          %v815 = vrot.slane %v814, 1
          %v816 = vadd.f32 %v814, %v815
          %v817 = vrot.slane %v799, 4
          %v818 = vadd.f32 %v799, %v817
          %v819 = vrot.slane %v818, 2
          %v820 = vadd.f32 %v818, %v819
          %v821 = vrot.slane %v820, 1
          %v822 = vadd.f32 %v820, %v821
          %v823 = vrot.slane %v800, 4
          %v824 = vadd.f32 %v800, %v823
          %v825 = vrot.slane %v824, 2
          %v826 = vadd.f32 %v824, %v825
          %v827 = vrot.slane %v826, 1
          %v828 = vadd.f32 %v826, %v827
          %v833 = vcombine.low %v810, %v816
          %v834 = vcombine.low %v822, %v828
          %v836 = vunpack.c.l.s4 1966171168
          %v837 = vunpack.c.0.s8 %v836
          %v838 = vlaneseq
          %v839 = vshrl.u32 %v838, 7
          %v840 = vsub.s32 %v837, %v839
          %v841 = vrot.slane %v833, %v840
          %v843 = vunpack.c.l.s4 1966171168
          %v844 = vunpack.c.0.s8 %v843
          %v845 = vlaneseq
          %v846 = vshrl.u32 %v845, 7
          %v847 = vsub.s32 %v844, %v846
          %v848 = vrot.slane %v834, %v847
          %v849 = vcombine.low %v841, %v848
          %v851 = vunpack.c.l.s4 1966171168
          %v852 = vunpack.c.0.s8 %v851
          %v853 = vlaneseq
          %v854 = vshrl.u32 %v853, 7
          %v855 = vsub.s32 %v852, %v854
          %v856 = vrot.slane %v849, %v855
          %v858 = vadd.f32 %v804, %v856
          %v859 = vlaneseq
          %vm860 = vcmp.ge.s32.totalorder %v859, 0
          %vm861 = vcmp.lt.s32.totalorder %v859, 512
          %vm862 = vmand %vm860, %vm861
          %863 = vst.msk [vmem:[#allocation2] sm:$0xf] %vm862, %v858
        $region56: #{tpu_custom_call.1} parent=35 // pred_fallthru
          _
        %p864 = scmp.eq.s32.totalorder %s24, 1
        // Predicated region
        $region57: #{tpu_custom_call.1} parent=35 // pred_check
          %p865 = pneg %p864
        $region58: #{tpu_custom_call.1} parent=35 // pred_check_branch
          %867 = sbr.rel (%p865) target = $region60
        $region59: #{tpu_custom_call.1} parent=35 // pred_region
          %v868 = vld [vmem:[#allocation2] sm:$0xf]
          %v870 = vlaneseq
          %v871 = vshrl.u32 %v870, 7
          %v872 = vsub.s32 0, %v871
          %v873 = vrot.slane %v868, %v872
          %v874 = vlaneseq
          %v875 = vshrl.u32 %v874, 7
          %v876 = vsub.s32 1, %v875
          %v877 = vrot.slane %v868, %v876
          %v878 = vlaneseq
          %v879 = vshrl.u32 %v878, 7
          %v880 = vsub.s32 2, %v879
          %v881 = vrot.slane %v868, %v880
          %v882 = vlaneseq
          %v883 = vshrl.u32 %v882, 7
          %v884 = vsub.s32 3, %v883
          %v885 = vrot.slane %v868, %v884
          %v890 = vmul.f32 %v797, %v873
          %v891 = vmul.f32 %v798, %v877
          %v892 = vmul.f32 %v799, %v881
          %v893 = vmul.f32 %v800, %v885
          %v894 = vadd.f32 %v890, %v891
          %v895 = vadd.f32 %v894, %v892
          %v896 = vadd.f32 %v895, %v893
          %897 = vadd.xlane.f32.xlu0 %v896
          %v898 = vpop.xlane.xlu0 %897
          %v899 = vadd.f32 %v898, 1.0
          %v900 = vmax.f32 %v899, 1e-06
          %v901 = vrsqrt.pop %v900
          %v902 = vpack.c.bf16 %v782, %v782
          %v903 = vpack.c.bf16 %v783, %v783
          %v904 = vpack.c.bf16 %v784, %v784
          %v905 = vpack.c.bf16 %v785, %v785
          %v906 = vld [vmem:[#allocation10] sm:$0xf]
          %v907 = vld [vmem:[#allocation10 + $0x4] sm:$0xf]
          %v908 = vld [vmem:[#allocation10 + $0x8] sm:$0xf]
          %v909 = vld [vmem:[#allocation10 + $0xc] sm:$0xf]
          %v910 = vld [vmem:[#allocation10 + $0x10] sm:$0xf]
          %v911 = vld [vmem:[#allocation10 + $0x14] sm:$0xf]
          %v912 = vld [vmem:[#allocation10 + $0x18] sm:$0xf]
          %v913 = vld [vmem:[#allocation10 + $0x1c] sm:$0xf]
          %v914 = vld [vmem:[#allocation10 + $0x20] sm:$0xf]
          %v915 = vld [vmem:[#allocation10 + $0x24] sm:$0xf]
          %v916 = vld [vmem:[#allocation10 + $0x28] sm:$0xf]
          %v917 = vld [vmem:[#allocation10 + $0x2c] sm:$0xf]
          %v918 = vld [vmem:[#allocation10 + $0x30] sm:$0xf]
          %v919 = vld [vmem:[#allocation10 + $0x34] sm:$0xf]
          %v920 = vld [vmem:[#allocation10 + $0x38] sm:$0xf]
          %v921 = vld [vmem:[#allocation10 + $0x3c] sm:$0xf]
          %v922 = vld [vmem:[#allocation10 + $0x40] sm:$0xf]
          %v923 = vld [vmem:[#allocation10 + $0x44] sm:$0xf]
          %v924 = vld [vmem:[#allocation10 + $0x48] sm:$0xf]
          %v925 = vld [vmem:[#allocation10 + $0x4c] sm:$0xf]
          %v926 = vld [vmem:[#allocation10 + $0x50] sm:$0xf]
          %v927 = vld [vmem:[#allocation10 + $0x54] sm:$0xf]
          %v928 = vld [vmem:[#allocation10 + $0x58] sm:$0xf]
          %v929 = vld [vmem:[#allocation10 + $0x5c] sm:$0xf]
          %v930 = vld [vmem:[#allocation10 + $0x60] sm:$0xf]
          %v931 = vld [vmem:[#allocation10 + $0x64] sm:$0xf]
          %v932 = vld [vmem:[#allocation10 + $0x68] sm:$0xf]
          %v933 = vld [vmem:[#allocation10 + $0x6c] sm:$0xf]
          %v934 = vld [vmem:[#allocation10 + $0x70] sm:$0xf]
          %v935 = vld [vmem:[#allocation10 + $0x74] sm:$0xf]
          %v936 = vld [vmem:[#allocation10 + $0x78] sm:$0xf]
          %v937 = vld [vmem:[#allocation10 + $0x7c] sm:$0xf]
          %v938 = vld [vmem:[#allocation10 + $0x80] sm:$0xf]
          %v939 = vld [vmem:[#allocation10 + $0x84] sm:$0xf]
          %v940 = vld [vmem:[#allocation10 + $0x88] sm:$0xf]
          %v941 = vld [vmem:[#allocation10 + $0x8c] sm:$0xf]
          %v942 = vld [vmem:[#allocation10 + $0x90] sm:$0xf]
          %v943 = vld [vmem:[#allocation10 + $0x94] sm:$0xf]
          %v944 = vld [vmem:[#allocation10 + $0x98] sm:$0xf]
          %v945 = vld [vmem:[#allocation10 + $0x9c] sm:$0xf]
          %v946 = vld [vmem:[#allocation10 + $0xa0] sm:$0xf]
          %v947 = vld [vmem:[#allocation10 + $0xa4] sm:$0xf]
          %v948 = vld [vmem:[#allocation10 + $0xa8] sm:$0xf]
          %v949 = vld [vmem:[#allocation10 + $0xac] sm:$0xf]
          %v950 = vld [vmem:[#allocation10 + $0xb0] sm:$0xf]
          %v951 = vld [vmem:[#allocation10 + $0xb4] sm:$0xf]
          %v952 = vld [vmem:[#allocation10 + $0xb8] sm:$0xf]
          %v953 = vld [vmem:[#allocation10 + $0xbc] sm:$0xf]
          %v954 = vld [vmem:[#allocation10 + $0xc0] sm:$0xf]
          %v955 = vld [vmem:[#allocation10 + $0xc4] sm:$0xf]
          %v956 = vld [vmem:[#allocation10 + $0xc8] sm:$0xf]
          %v957 = vld [vmem:[#allocation10 + $0xcc] sm:$0xf]
          %v958 = vld [vmem:[#allocation10 + $0xd0] sm:$0xf]
          %v959 = vld [vmem:[#allocation10 + $0xd4] sm:$0xf]
          %v960 = vld [vmem:[#allocation10 + $0xd8] sm:$0xf]
          %v961 = vld [vmem:[#allocation10 + $0xdc] sm:$0xf]
          %v962 = vld [vmem:[#allocation10 + $0xe0] sm:$0xf]
          %v963 = vld [vmem:[#allocation10 + $0xe4] sm:$0xf]
          %v964 = vld [vmem:[#allocation10 + $0xe8] sm:$0xf]
          %v965 = vld [vmem:[#allocation10 + $0xec] sm:$0xf]
          %v966 = vld [vmem:[#allocation10 + $0xf0] sm:$0xf]
          %v967 = vld [vmem:[#allocation10 + $0xf4] sm:$0xf]
          %v968 = vld [vmem:[#allocation10 + $0xf8] sm:$0xf]
          %v969 = vld [vmem:[#allocation10 + $0xfc] sm:$0xf]
          %v1034 = vunpack.c.l.b16 %v906
          %v1035 = vunpack.c.l.b16 %v907
          %v1036 = vunpack.c.l.b16 %v908
          %v1037 = vunpack.c.l.b16 %v909
          %v1038 = vunpack.c.l.b16 %v910
          %v1039 = vunpack.c.l.b16 %v911
          %v1040 = vunpack.c.l.b16 %v912
          %v1041 = vunpack.c.l.b16 %v913
          %v1042 = vunpack.c.l.b16 %v914
          %v1043 = vunpack.c.l.b16 %v915
          %v1044 = vunpack.c.l.b16 %v916
          %v1045 = vunpack.c.l.b16 %v917
          %v1046 = vunpack.c.l.b16 %v918
          %v1047 = vunpack.c.l.b16 %v919
          %v1048 = vunpack.c.l.b16 %v920
          %v1049 = vunpack.c.l.b16 %v921
          %v1050 = vunpack.c.l.b16 %v922
          %v1051 = vunpack.c.l.b16 %v923
          %v1052 = vunpack.c.l.b16 %v924
          %v1053 = vunpack.c.l.b16 %v925
          %v1054 = vunpack.c.l.b16 %v926
          %v1055 = vunpack.c.l.b16 %v927
          %v1056 = vunpack.c.l.b16 %v928
          %v1057 = vunpack.c.l.b16 %v929
          %v1058 = vunpack.c.l.b16 %v930
          %v1059 = vunpack.c.l.b16 %v931
          %v1060 = vunpack.c.l.b16 %v932
          %v1061 = vunpack.c.l.b16 %v933
          %v1062 = vunpack.c.l.b16 %v934
          %v1063 = vunpack.c.l.b16 %v935
          %v1064 = vunpack.c.l.b16 %v936
          %v1065 = vunpack.c.l.b16 %v937
          %v1066 = vunpack.c.l.b16 %v938
          %v1067 = vunpack.c.l.b16 %v939
          %v1068 = vunpack.c.l.b16 %v940
          %v1069 = vunpack.c.l.b16 %v941
          %v1070 = vunpack.c.l.b16 %v942
          %v1071 = vunpack.c.l.b16 %v943
          %v1072 = vunpack.c.l.b16 %v944
          %v1073 = vunpack.c.l.b16 %v945
          %v1074 = vunpack.c.l.b16 %v946
          %v1075 = vunpack.c.l.b16 %v947
          %v1076 = vunpack.c.l.b16 %v948
          %v1077 = vunpack.c.l.b16 %v949
          %v1078 = vunpack.c.l.b16 %v950
          %v1079 = vunpack.c.l.b16 %v951
          %v1080 = vunpack.c.l.b16 %v952
          %v1081 = vunpack.c.l.b16 %v953
          %v1082 = vunpack.c.l.b16 %v954
          %v1083 = vunpack.c.l.b16 %v955
          %v1084 = vunpack.c.l.b16 %v956
          %v1085 = vunpack.c.l.b16 %v957
          %v1086 = vunpack.c.l.b16 %v958
          %v1087 = vunpack.c.l.b16 %v959
          %v1088 = vunpack.c.l.b16 %v960
          %v1089 = vunpack.c.l.b16 %v961
          %v1090 = vunpack.c.l.b16 %v962
          %v1091 = vunpack.c.l.b16 %v963
          %v1092 = vunpack.c.l.b16 %v964
          %v1093 = vunpack.c.l.b16 %v965
          %v1094 = vunpack.c.l.b16 %v966
          %v1095 = vunpack.c.l.b16 %v967
          %v1096 = vunpack.c.l.b16 %v968
          %v1097 = vunpack.c.l.b16 %v969
          %v1098 = vpack.c.b16 %v1035, %v1034
          %v1099 = vpack.c.b16 %v1037, %v1036
          %v1100 = vpack.c.b16 %v1039, %v1038
          %v1101 = vpack.c.b16 %v1041, %v1040
          %v1102 = vpack.c.b16 %v1043, %v1042
          %v1103 = vpack.c.b16 %v1045, %v1044
          %v1104 = vpack.c.b16 %v1047, %v1046
          %v1105 = vpack.c.b16 %v1049, %v1048
          %v1106 = vpack.c.b16 %v1051, %v1050
          %v1107 = vpack.c.b16 %v1053, %v1052
          %v1108 = vpack.c.b16 %v1055, %v1054
          %v1109 = vpack.c.b16 %v1057, %v1056
          %v1110 = vpack.c.b16 %v1059, %v1058
          %v1111 = vpack.c.b16 %v1061, %v1060
          %v1112 = vpack.c.b16 %v1063, %v1062
          %v1113 = vpack.c.b16 %v1065, %v1064
          %v1114 = vpack.c.b16 %v1067, %v1066
          %v1115 = vpack.c.b16 %v1069, %v1068
          %v1116 = vpack.c.b16 %v1071, %v1070
          %v1117 = vpack.c.b16 %v1073, %v1072
          %v1118 = vpack.c.b16 %v1075, %v1074
          %v1119 = vpack.c.b16 %v1077, %v1076
          %v1120 = vpack.c.b16 %v1079, %v1078
          %v1121 = vpack.c.b16 %v1081, %v1080
          %v1122 = vpack.c.b16 %v1083, %v1082
          %v1123 = vpack.c.b16 %v1085, %v1084
          %v1124 = vpack.c.b16 %v1087, %v1086
          %v1125 = vpack.c.b16 %v1089, %v1088
          %v1126 = vpack.c.b16 %v1091, %v1090
          %v1127 = vpack.c.b16 %v1093, %v1092
          %v1128 = vpack.c.b16 %v1095, %v1094
          %v1129 = vpack.c.b16 %v1097, %v1096
          %1162 = vmatprep.subr.bf16.mxu0 0
          %1163 = vmatpush1.bf16.msra.mxu0 %v1098
          %1164 = vmatprep.subr.bf16.mxu0 0
          %1165 = vmatpush1.bf16.msra.mxu0 %v1099
          %1166 = vmatprep.subr.bf16.mxu0 0
          %1167 = vmatpush1.bf16.msra.mxu0 %v1100
          %1168 = vmatprep.subr.bf16.mxu0 0
          %1169 = vmatpush1.bf16.msra.mxu0 %v1101
          %1170 = vmatprep.subr.bf16.mxu0 0
          %1171 = vmatpush1.bf16.msra.mxu0 %v1102
          %1172 = vmatprep.subr.bf16.mxu0 0
          %1173 = vmatpush1.bf16.msra.mxu0 %v1103
          %1174 = vmatprep.subr.bf16.mxu0 0
          %1175 = vmatpush1.bf16.msra.mxu0 %v1104
          %1176 = vmatprep.subr.bf16.mxu0 0
          %1177 = vmatpush1.bf16.msra.mxu0 %v1105
          %1178 = vmatprep.subr.bf16.mxu0 0
          %1179 = vmatpush1.bf16.msra.mxu0 %v1106
          %1180 = vmatprep.subr.bf16.mxu0 0
          %1181 = vmatpush1.bf16.msra.mxu0 %v1107
          %1182 = vmatprep.subr.bf16.mxu0 0
          %1183 = vmatpush1.bf16.msra.mxu0 %v1108
          %1184 = vmatprep.subr.bf16.mxu0 0
          %1185 = vmatpush1.bf16.msra.mxu0 %v1109
          %1186 = vmatprep.subr.bf16.mxu0 0
          %1187 = vmatpush1.bf16.msra.mxu0 %v1110
          %1188 = vmatprep.subr.bf16.mxu0 0
          %1189 = vmatpush1.bf16.msra.mxu0 %v1111
          %1190 = vmatprep.subr.bf16.mxu0 0
          %1191 = vmatpush1.bf16.msra.mxu0 %v1112
          %1192 = vmatprep.subr.bf16.mxu0 0
          %1193 = vmatpush1.bf16.msra.mxu0 %v1113
          %1194 = vmatprep.mubr.bf16.mxu0 %v903
          %1195 = vmatmul.mubr.bf16.gmra.mrb[0].mxu0 %v902
          %v1196 = vpop.f32.mrb[0].mxu0
          %v1197 = vadd.f32 0.0, %v1196
          %v1198 = vpop.f32.mrb[0].mxu0
          %v1199 = vpop.f32.mrb[0].mxu0
          %v1200 = vpop.f32.mrb[0].mxu0
          %1201 = vdwg.mxu0
          %1202 = vmatprep.subr.bf16.mxu0 0
          %1203 = vmatpush1.bf16.msra.mxu0 %v1114
          %1204 = vmatprep.subr.bf16.mxu0 0
          %1205 = vmatpush1.bf16.msra.mxu0 %v1115
          %1206 = vmatprep.subr.bf16.mxu0 0
          %1207 = vmatpush1.bf16.msra.mxu0 %v1116
          %1208 = vmatprep.subr.bf16.mxu0 0
          %1209 = vmatpush1.bf16.msra.mxu0 %v1117
          %1210 = vmatprep.subr.bf16.mxu0 0
          %1211 = vmatpush1.bf16.msra.mxu0 %v1118
          %1212 = vmatprep.subr.bf16.mxu0 0
          %1213 = vmatpush1.bf16.msra.mxu0 %v1119
          %1214 = vmatprep.subr.bf16.mxu0 0
          %1215 = vmatpush1.bf16.msra.mxu0 %v1120
          %1216 = vmatprep.subr.bf16.mxu0 0
          %1217 = vmatpush1.bf16.msra.mxu0 %v1121
          %1218 = vmatprep.subr.bf16.mxu0 0
          %1219 = vmatpush1.bf16.msra.mxu0 %v1122
          %1220 = vmatprep.subr.bf16.mxu0 0
          %1221 = vmatpush1.bf16.msra.mxu0 %v1123
          %1222 = vmatprep.subr.bf16.mxu0 0
          %1223 = vmatpush1.bf16.msra.mxu0 %v1124
          %1224 = vmatprep.subr.bf16.mxu0 0
          %1225 = vmatpush1.bf16.msra.mxu0 %v1125
          %1226 = vmatprep.subr.bf16.mxu0 0
          %1227 = vmatpush1.bf16.msra.mxu0 %v1126
          %1228 = vmatprep.subr.bf16.mxu0 0
          %1229 = vmatpush1.bf16.msra.mxu0 %v1127
          %1230 = vmatprep.subr.bf16.mxu0 0
          %1231 = vmatpush1.bf16.msra.mxu0 %v1128
          %1232 = vmatprep.subr.bf16.mxu0 0
          %1233 = vmatpush1.bf16.msra.mxu0 %v1129
          %1234 = vmatprep.mubr.bf16.mxu0 %v905
          %1235 = vmatmul.mubr.bf16.gmra.mrb[0].mxu0 %v904
          %v1236 = vpop.f32.mrb[0].mxu0
          %v1237 = vadd.f32 %v1197, %v1236
          %v1238 = vpop.f32.mrb[0].mxu0
          %v1239 = vpop.f32.mrb[0].mxu0
          %v1240 = vpop.f32.mrb[0].mxu0
          %1241 = vdwg.mxu0
          %v1242 = vmul.f32 %v901, %v1237
          %v1243 = vld [vmem:[#allocation3] sm:$0xff]
          %v1244 = vld [vmem:[#allocation3 + $0x8] sm:$0xff]
          %v1245 = vld [vmem:[#allocation3 + $0x10] sm:$0xff]
          %v1246 = vld [vmem:[#allocation3 + $0x18] sm:$0xff]
          %v1247 = vld [vmem:[#allocation3 + $0x20] sm:$0xff]
          %v1248 = vld [vmem:[#allocation3 + $0x28] sm:$0xff]
          %v1249 = vld [vmem:[#allocation3 + $0x30] sm:$0xff]
          %v1250 = vld [vmem:[#allocation3 + $0x38] sm:$0xff]
          %v1251 = vld [vmem:[#allocation3 + $0x40] sm:$0xff]
          %v1252 = vld [vmem:[#allocation3 + $0x48] sm:$0xff]
          %v1253 = vld [vmem:[#allocation3 + $0x50] sm:$0xff]
          %v1254 = vld [vmem:[#allocation3 + $0x58] sm:$0xff]
          %v1255 = vld [vmem:[#allocation3 + $0x60] sm:$0xff]
          %v1256 = vld [vmem:[#allocation3 + $0x68] sm:$0xff]
          %v1257 = vld [vmem:[#allocation3 + $0x70] sm:$0xff]
          %v1258 = vld [vmem:[#allocation3 + $0x78] sm:$0xff]
          %v1259 = vld [vmem:[#allocation3 + $0x80] sm:$0xff]
          %v1260 = vld [vmem:[#allocation3 + $0x88] sm:$0xff]
          %v1261 = vld [vmem:[#allocation3 + $0x90] sm:$0xff]
          %v1262 = vld [vmem:[#allocation3 + $0x98] sm:$0xff]
          %v1263 = vld [vmem:[#allocation3 + $0xa0] sm:$0xff]
          %v1264 = vld [vmem:[#allocation3 + $0xa8] sm:$0xff]
          %v1265 = vld [vmem:[#allocation3 + $0xb0] sm:$0xff]
          %v1266 = vld [vmem:[#allocation3 + $0xb8] sm:$0xff]
          %v1267 = vld [vmem:[#allocation3 + $0xc0] sm:$0xff]
          %v1268 = vld [vmem:[#allocation3 + $0xc8] sm:$0xff]
          %v1269 = vld [vmem:[#allocation3 + $0xd0] sm:$0xff]
          %v1270 = vld [vmem:[#allocation3 + $0xd8] sm:$0xff]
          %v1271 = vld [vmem:[#allocation3 + $0xe0] sm:$0xff]
          %v1272 = vld [vmem:[#allocation3 + $0xe8] sm:$0xff]
          %v1273 = vld [vmem:[#allocation3 + $0xf0] sm:$0xff]
          %v1274 = vld [vmem:[#allocation3 + $0xf8] sm:$0xff]
          %v1275 = vld [vmem:[#allocation3 + $0x100] sm:$0xff]
          %v1276 = vld [vmem:[#allocation3 + $0x108] sm:$0xff]
          %v1277 = vld [vmem:[#allocation3 + $0x110] sm:$0xff]
          %v1278 = vld [vmem:[#allocation3 + $0x118] sm:$0xff]
          %v1279 = vld [vmem:[#allocation3 + $0x120] sm:$0xff]
          %v1280 = vld [vmem:[#allocation3 + $0x128] sm:$0xff]
          %v1281 = vld [vmem:[#allocation3 + $0x130] sm:$0xff]
          %v1282 = vld [vmem:[#allocation3 + $0x138] sm:$0xff]
          %v1283 = vld [vmem:[#allocation3 + $0x140] sm:$0xff]
          %v1284 = vld [vmem:[#allocation3 + $0x148] sm:$0xff]
          %v1285 = vld [vmem:[#allocation3 + $0x150] sm:$0xff]
          %v1286 = vld [vmem:[#allocation3 + $0x158] sm:$0xff]
          %v1287 = vld [vmem:[#allocation3 + $0x160] sm:$0xff]
          %v1288 = vld [vmem:[#allocation3 + $0x168] sm:$0xff]
          %v1289 = vld [vmem:[#allocation3 + $0x170] sm:$0xff]
          %v1290 = vld [vmem:[#allocation3 + $0x178] sm:$0xff]
          %v1291 = vld [vmem:[#allocation3 + $0x180] sm:$0xff]
          %v1292 = vld [vmem:[#allocation3 + $0x188] sm:$0xff]
          %v1293 = vld [vmem:[#allocation3 + $0x190] sm:$0xff]
          %v1294 = vld [vmem:[#allocation3 + $0x198] sm:$0xff]
          %v1295 = vld [vmem:[#allocation3 + $0x1a0] sm:$0xff]
          %v1296 = vld [vmem:[#allocation3 + $0x1a8] sm:$0xff]
          %v1297 = vld [vmem:[#allocation3 + $0x1b0] sm:$0xff]
          %v1298 = vld [vmem:[#allocation3 + $0x1b8] sm:$0xff]
          %v1299 = vld [vmem:[#allocation3 + $0x1c0] sm:$0xff]
          %v1300 = vld [vmem:[#allocation3 + $0x1c8] sm:$0xff]
          %v1301 = vld [vmem:[#allocation3 + $0x1d0] sm:$0xff]
          %v1302 = vld [vmem:[#allocation3 + $0x1d8] sm:$0xff]
          %v1303 = vld [vmem:[#allocation3 + $0x1e0] sm:$0xff]
          %v1304 = vld [vmem:[#allocation3 + $0x1e8] sm:$0xff]
          %v1305 = vld [vmem:[#allocation3 + $0x1f0] sm:$0xff]
          %v1306 = vld [vmem:[#allocation3 + $0x1f8] sm:$0xff]
          %v1307 = vpack.c.bf16 %v797, %v797
          %v1308 = vpack.c.bf16 %v798, %v798
          %v1309 = vpack.c.bf16 %v799, %v799
          %v1310 = vpack.c.bf16 %v800, %v800
          %v1311 = vpack.c.bf16 %v1242, %v1242
          %1312 = vxpose.xlu0.c.b16.start [1/8] %v1307, 128
          %1313 = vxpose.xlu0.c.b16.cont [2/8] 0, 128
          %1314 = vxpose.xlu0.c.b16.cont [3/8] 0, 128
          %1315 = vxpose.xlu0.c.b16.cont [4/8] 0, 128
          %1316 = vxpose.xlu0.c.b16.cont [5/8] 0, 128
          %1317 = vxpose.xlu0.c.b16.cont [6/8] 0, 128
          %1318 = vxpose.xlu0.c.b16.cont [7/8] 0, 128
          %1319 = vxpose.xlu0.c.b16.end [8/8] 0, 128
          %v1320 = vpop.trf.xlu0
          %v1321 = vpop.trf.xlu0
          %v1322 = vpop.trf.xlu0
          %v1323 = vpop.trf.xlu0
          %v1324 = vpop.trf.xlu0
          %v1325 = vpop.trf.xlu0
          %v1326 = vpop.trf.xlu0
          %v1327 = vpop.trf.xlu0
          %1328 = vxpose.xlu0.c.b16.start [1/8] %v1308, 128
          %1329 = vxpose.xlu0.c.b16.cont [2/8] 0, 128
          %1330 = vxpose.xlu0.c.b16.cont [3/8] 0, 128
          %1331 = vxpose.xlu0.c.b16.cont [4/8] 0, 128
          %1332 = vxpose.xlu0.c.b16.cont [5/8] 0, 128
          %1333 = vxpose.xlu0.c.b16.cont [6/8] 0, 128
          %1334 = vxpose.xlu0.c.b16.cont [7/8] 0, 128
          %1335 = vxpose.xlu0.c.b16.end [8/8] 0, 128
          %v1336 = vpop.trf.xlu0
          %v1337 = vpop.trf.xlu0
          %v1338 = vpop.trf.xlu0
          %v1339 = vpop.trf.xlu0
          %v1340 = vpop.trf.xlu0
          %v1341 = vpop.trf.xlu0
          %v1342 = vpop.trf.xlu0
          %v1343 = vpop.trf.xlu0
          %1344 = vxpose.xlu0.c.b16.start [1/8] %v1309, 128
          %1345 = vxpose.xlu0.c.b16.cont [2/8] 0, 128
          %1346 = vxpose.xlu0.c.b16.cont [3/8] 0, 128
          %1347 = vxpose.xlu0.c.b16.cont [4/8] 0, 128
          %1348 = vxpose.xlu0.c.b16.cont [5/8] 0, 128
          %1349 = vxpose.xlu0.c.b16.cont [6/8] 0, 128
          %1350 = vxpose.xlu0.c.b16.cont [7/8] 0, 128
          %1351 = vxpose.xlu0.c.b16.end [8/8] 0, 128
          %v1352 = vpop.trf.xlu0
          %v1353 = vpop.trf.xlu0
          %v1354 = vpop.trf.xlu0
          %v1355 = vpop.trf.xlu0
          %v1356 = vpop.trf.xlu0
          %v1357 = vpop.trf.xlu0
          %v1358 = vpop.trf.xlu0
          %v1359 = vpop.trf.xlu0
          %1360 = vxpose.xlu0.c.b16.start [1/8] %v1310, 128
          %1361 = vxpose.xlu0.c.b16.cont [2/8] 0, 128
          %1362 = vxpose.xlu0.c.b16.cont [3/8] 0, 128
          %1363 = vxpose.xlu0.c.b16.cont [4/8] 0, 128
          %1364 = vxpose.xlu0.c.b16.cont [5/8] 0, 128
          %1365 = vxpose.xlu0.c.b16.cont [6/8] 0, 128
          %1366 = vxpose.xlu0.c.b16.cont [7/8] 0, 128
          %1367 = vxpose.xlu0.c.b16.end [8/8] 0, 128
          %v1368 = vpop.trf.xlu0
          %v1369 = vpop.trf.xlu0
          %v1370 = vpop.trf.xlu0
          %v1371 = vpop.trf.xlu0
          %v1372 = vpop.trf.xlu0
          %v1373 = vpop.trf.xlu0
          %v1374 = vpop.trf.xlu0
          %v1375 = vpop.trf.xlu0
          %v1377 = vsel %vm331, %v1320, 0
          %v1380 = vsel %vm331, %v1321, 0
          %v1383 = vsel %vm331, %v1322, 0
          %v1386 = vsel %vm331, %v1323, 0
          %v1389 = vsel %vm331, %v1324, 0
          %v1392 = vsel %vm331, %v1325, 0
          %v1395 = vsel %vm331, %v1326, 0
          %v1398 = vsel %vm331, %v1327, 0
          %v1401 = vsel %vm331, %v1336, 0
          %v1404 = vsel %vm331, %v1337, 0
          %v1407 = vsel %vm331, %v1338, 0
          %v1410 = vsel %vm331, %v1339, 0
          %v1413 = vsel %vm331, %v1340, 0
          %v1416 = vsel %vm331, %v1341, 0
          %v1419 = vsel %vm331, %v1342, 0
          %v1422 = vsel %vm331, %v1343, 0
          %v1425 = vsel %vm331, %v1352, 0
          %v1428 = vsel %vm331, %v1353, 0
          %v1431 = vsel %vm331, %v1354, 0
          %v1434 = vsel %vm331, %v1355, 0
          %v1437 = vsel %vm331, %v1356, 0
          %v1440 = vsel %vm331, %v1357, 0
          %v1443 = vsel %vm331, %v1358, 0
          %v1446 = vsel %vm331, %v1359, 0
          %v1449 = vsel %vm331, %v1368, 0
          %v1452 = vsel %vm331, %v1369, 0
          %v1455 = vsel %vm331, %v1370, 0
          %v1458 = vsel %vm331, %v1371, 0
          %v1461 = vsel %vm331, %v1372, 0
          %v1464 = vsel %vm331, %v1373, 0
          %v1467 = vsel %vm331, %v1374, 0
          %v1470 = vsel %vm331, %v1375, 0
          %vm1472 = vcmask 1043456
          %v1474 = vsel %vm1472, %v1311, 0
          %1476 = vmatprep.subr.bf16.mxu0 0
          %1477 = vmatpush1.bf16.msra.mxu0 %v1474
          %1478 = vmatprep.subr.bf16.mxu0 0
          %1479 = vmatpush1.bf16.msra.mxu0 0
          %1480 = vmatprep.subr.bf16.mxu0 0
          %1481 = vmatpush1.bf16.msra.mxu0 0
          %1482 = vmatprep.subr.bf16.mxu0 0
          %1483 = vmatpush1.bf16.msra.mxu0 0
          %1484 = vmatprep.subr.bf16.mxu0 0
          %1485 = vmatpush1.bf16.msra.mxu0 0
          %1486 = vmatprep.subr.bf16.mxu0 0
          %1487 = vmatpush1.bf16.msra.mxu0 0
          %1488 = vmatprep.subr.bf16.mxu0 0
          %1489 = vmatpush1.bf16.msra.mxu0 0
          %1490 = vmatprep.subr.bf16.mxu0 0
          %1491 = vmatpush1.bf16.msra.mxu0 0
          %1492 = vmatprep.subr.bf16.mxu0 0
          %1493 = vmatpush1.bf16.msra.mxu0 0
          %1494 = vmatprep.subr.bf16.mxu0 0
          %1495 = vmatpush1.bf16.msra.mxu0 0
          %1496 = vmatprep.subr.bf16.mxu0 0
          %1497 = vmatpush1.bf16.msra.mxu0 0
          %1498 = vmatprep.subr.bf16.mxu0 0
          %1499 = vmatpush1.bf16.msra.mxu0 0
          %1500 = vmatprep.subr.bf16.mxu0 0
          %1501 = vmatpush1.bf16.msra.mxu0 0
          %1502 = vmatprep.subr.bf16.mxu0 0
          %1503 = vmatpush1.bf16.msra.mxu0 0
          %1504 = vmatprep.subr.bf16.mxu0 0
          %1505 = vmatpush1.bf16.msra.mxu0 0
          %1506 = vmatprep.subr.bf16.mxu0 0
          %1507 = vmatpush1.bf16.msra.mxu0 0
          %1508 = vmatprep.mubr.bf16.mxu0 0
          %1509 = vmatmul.mubr.bf16.gmra.mrb[0].mxu0 %v1377
          %v1510 = vpop.f32.mrb[0].mxu0
          %v1511 = vadd.f32 0.0, %v1510
          %v1512 = vpop.f32.mrb[0].mxu0
          %v1513 = vpop.f32.mrb[0].mxu0
          %v1514 = vadd.f32 0.0, %v1513
          %v1515 = vpop.f32.mrb[0].mxu0
          %1516 = vmatprep.mubr.bf16.mxu0 0
          %1517 = vmatmul.mubr.bf16.gmra.mrb[0].mxu0 %v1380
          %v1518 = vpop.f32.mrb[0].mxu0
          %v1519 = vadd.f32 0.0, %v1518
          %v1520 = vpop.f32.mrb[0].mxu0
          %v1521 = vpop.f32.mrb[0].mxu0
          %v1522 = vadd.f32 0.0, %v1521
          %v1523 = vpop.f32.mrb[0].mxu0
          %1524 = vmatprep.mubr.bf16.mxu0 0
          %1525 = vmatmul.mubr.bf16.gmra.mrb[0].mxu0 %v1383
          %v1526 = vpop.f32.mrb[0].mxu0
          %v1527 = vadd.f32 0.0, %v1526
          %v1528 = vpop.f32.mrb[0].mxu0
          %v1529 = vpop.f32.mrb[0].mxu0
          %v1530 = vadd.f32 0.0, %v1529
          %v1531 = vpop.f32.mrb[0].mxu0
          %1532 = vmatprep.mubr.bf16.mxu0 0
          %1533 = vmatmul.mubr.bf16.gmra.mrb[0].mxu0 %v1386
          %v1534 = vpop.f32.mrb[0].mxu0
          %v1535 = vadd.f32 0.0, %v1534
          %v1536 = vpop.f32.mrb[0].mxu0
          %v1537 = vpop.f32.mrb[0].mxu0
          %v1538 = vadd.f32 0.0, %v1537
          %v1539 = vpop.f32.mrb[0].mxu0
          %1540 = vmatprep.mubr.bf16.mxu0 0
          %1541 = vmatmul.mubr.bf16.gmra.mrb[0].mxu0 %v1389
          %v1542 = vpop.f32.mrb[0].mxu0
          %v1543 = vadd.f32 0.0, %v1542
          %v1544 = vpop.f32.mrb[0].mxu0
          %v1545 = vpop.f32.mrb[0].mxu0
          %v1546 = vadd.f32 0.0, %v1545
          %v1547 = vpop.f32.mrb[0].mxu0
          %1548 = vmatprep.mubr.bf16.mxu0 0
          %1549 = vmatmul.mubr.bf16.gmra.mrb[0].mxu0 %v1392
          %v1550 = vpop.f32.mrb[0].mxu0
          %v1551 = vadd.f32 0.0, %v1550
          %v1552 = vpop.f32.mrb[0].mxu0
          %v1553 = vpop.f32.mrb[0].mxu0
          %v1554 = vadd.f32 0.0, %v1553
          %v1555 = vpop.f32.mrb[0].mxu0
          %1556 = vmatprep.mubr.bf16.mxu0 0
          %1557 = vmatmul.mubr.bf16.gmra.mrb[0].mxu0 %v1395
          %v1558 = vpop.f32.mrb[0].mxu0
          %v1559 = vadd.f32 0.0, %v1558
          %v1560 = vpop.f32.mrb[0].mxu0
          %v1561 = vpop.f32.mrb[0].mxu0
          %v1562 = vadd.f32 0.0, %v1561
          %v1563 = vpop.f32.mrb[0].mxu0
          %1564 = vmatprep.mubr.bf16.mxu0 0
          %1565 = vmatmul.mubr.bf16.gmra.mrb[0].mxu0 %v1398
          %v1566 = vpop.f32.mrb[0].mxu0
          %v1567 = vadd.f32 0.0, %v1566
          %v1568 = vpop.f32.mrb[0].mxu0
          %v1569 = vpop.f32.mrb[0].mxu0
          %v1570 = vadd.f32 0.0, %v1569
          %v1571 = vpop.f32.mrb[0].mxu0
          %1572 = vmatprep.mubr.bf16.mxu0 0
          %1573 = vmatmul.mubr.bf16.gmra.mrb[0].mxu0 %v1401
          %v1574 = vpop.f32.mrb[0].mxu0
          %v1575 = vadd.f32 0.0, %v1574
          %v1576 = vpop.f32.mrb[0].mxu0
          %v1577 = vpop.f32.mrb[0].mxu0
          %v1578 = vadd.f32 0.0, %v1577
          %v1579 = vpop.f32.mrb[0].mxu0
          %1580 = vmatprep.mubr.bf16.mxu0 0
          %1581 = vmatmul.mubr.bf16.gmra.mrb[0].mxu0 %v1404
          %v1582 = vpop.f32.mrb[0].mxu0
          %v1583 = vadd.f32 0.0, %v1582
          %v1584 = vpop.f32.mrb[0].mxu0
          %v1585 = vpop.f32.mrb[0].mxu0
          %v1586 = vadd.f32 0.0, %v1585
          %v1587 = vpop.f32.mrb[0].mxu0
          %1588 = vmatprep.mubr.bf16.mxu0 0
          %1589 = vmatmul.mubr.bf16.gmra.mrb[0].mxu0 %v1407
          %v1590 = vpop.f32.mrb[0].mxu0
          %v1591 = vadd.f32 0.0, %v1590
          %v1592 = vpop.f32.mrb[0].mxu0
          %v1593 = vpop.f32.mrb[0].mxu0
          %v1594 = vadd.f32 0.0, %v1593
          %v1595 = vpop.f32.mrb[0].mxu0
          %1596 = vmatprep.mubr.bf16.mxu0 0
          %1597 = vmatmul.mubr.bf16.gmra.mrb[0].mxu0 %v1410
          %v1598 = vpop.f32.mrb[0].mxu0
          %v1599 = vadd.f32 0.0, %v1598
          %v1600 = vpop.f32.mrb[0].mxu0
          %v1601 = vpop.f32.mrb[0].mxu0
          %v1602 = vadd.f32 0.0, %v1601
          %v1603 = vpop.f32.mrb[0].mxu0
          %1604 = vmatprep.mubr.bf16.mxu0 0
          %1605 = vmatmul.mubr.bf16.gmra.mrb[0].mxu0 %v1413
          %v1606 = vpop.f32.mrb[0].mxu0
          %v1607 = vadd.f32 0.0, %v1606
          %v1608 = vpop.f32.mrb[0].mxu0
          %v1609 = vpop.f32.mrb[0].mxu0
          %v1610 = vadd.f32 0.0, %v1609
          %v1611 = vpop.f32.mrb[0].mxu0
          %1612 = vmatprep.mubr.bf16.mxu0 0
          %1613 = vmatmul.mubr.bf16.gmra.mrb[0].mxu0 %v1416
          %v1614 = vpop.f32.mrb[0].mxu0
          %v1615 = vadd.f32 0.0, %v1614
          %v1616 = vpop.f32.mrb[0].mxu0
          %v1617 = vpop.f32.mrb[0].mxu0
          %v1618 = vadd.f32 0.0, %v1617
          %v1619 = vpop.f32.mrb[0].mxu0
          %1620 = vmatprep.mubr.bf16.mxu0 0
          %1621 = vmatmul.mubr.bf16.gmra.mrb[0].mxu0 %v1419
          %v1622 = vpop.f32.mrb[0].mxu0
          %v1623 = vadd.f32 0.0, %v1622
          %v1624 = vpop.f32.mrb[0].mxu0
          %v1625 = vpop.f32.mrb[0].mxu0
          %v1626 = vadd.f32 0.0, %v1625
          %v1627 = vpop.f32.mrb[0].mxu0
          %1628 = vmatprep.mubr.bf16.mxu0 0
          %1629 = vmatmul.mubr.bf16.gmra.mrb[0].mxu0 %v1422
          %v1630 = vpop.f32.mrb[0].mxu0
          %v1631 = vadd.f32 0.0, %v1630
          %v1632 = vpop.f32.mrb[0].mxu0
          %v1633 = vpop.f32.mrb[0].mxu0
          %v1634 = vadd.f32 0.0, %v1633
          %v1635 = vpop.f32.mrb[0].mxu0
          %1636 = vmatprep.mubr.bf16.mxu0 0
          %1637 = vmatmul.mubr.bf16.gmra.mrb[0].mxu0 %v1425
          %v1638 = vpop.f32.mrb[0].mxu0
          %v1639 = vadd.f32 0.0, %v1638
          %v1640 = vpop.f32.mrb[0].mxu0
          %v1641 = vpop.f32.mrb[0].mxu0
          %v1642 = vadd.f32 0.0, %v1641
          %v1643 = vpop.f32.mrb[0].mxu0
          %1644 = vmatprep.mubr.bf16.mxu0 0
          %1645 = vmatmul.mubr.bf16.gmra.mrb[0].mxu0 %v1428
          %v1646 = vpop.f32.mrb[0].mxu0
          %v1647 = vadd.f32 0.0, %v1646
          %v1648 = vpop.f32.mrb[0].mxu0
          %v1649 = vpop.f32.mrb[0].mxu0
          %v1650 = vadd.f32 0.0, %v1649
          %v1651 = vpop.f32.mrb[0].mxu0
          %1652 = vmatprep.mubr.bf16.mxu0 0
          %1653 = vmatmul.mubr.bf16.gmra.mrb[0].mxu0 %v1431
          %v1654 = vpop.f32.mrb[0].mxu0
          %v1655 = vadd.f32 0.0, %v1654
          %v1656 = vpop.f32.mrb[0].mxu0
          %v1657 = vpop.f32.mrb[0].mxu0
          %v1658 = vadd.f32 0.0, %v1657
          %v1659 = vpop.f32.mrb[0].mxu0
          %1660 = vmatprep.mubr.bf16.mxu0 0
          %1661 = vmatmul.mubr.bf16.gmra.mrb[0].mxu0 %v1434
          %v1662 = vpop.f32.mrb[0].mxu0
          %v1663 = vadd.f32 0.0, %v1662
          %v1664 = vpop.f32.mrb[0].mxu0
          %v1665 = vpop.f32.mrb[0].mxu0
          %v1666 = vadd.f32 0.0, %v1665
          %v1667 = vpop.f32.mrb[0].mxu0
          %1668 = vmatprep.mubr.bf16.mxu0 0
          %1669 = vmatmul.mubr.bf16.gmra.mrb[0].mxu0 %v1437
          %v1670 = vpop.f32.mrb[0].mxu0
          %v1671 = vadd.f32 0.0, %v1670
          %v1672 = vpop.f32.mrb[0].mxu0
          %v1673 = vpop.f32.mrb[0].mxu0
          %v1674 = vadd.f32 0.0, %v1673
          %v1675 = vpop.f32.mrb[0].mxu0
          %1676 = vmatprep.mubr.bf16.mxu0 0
          %1677 = vmatmul.mubr.bf16.gmra.mrb[0].mxu0 %v1440
          %v1678 = vpop.f32.mrb[0].mxu0
          %v1679 = vadd.f32 0.0, %v1678
          %v1680 = vpop.f32.mrb[0].mxu0
          %v1681 = vpop.f32.mrb[0].mxu0
          %v1682 = vadd.f32 0.0, %v1681
          %v1683 = vpop.f32.mrb[0].mxu0
          %1684 = vmatprep.mubr.bf16.mxu0 0
          %1685 = vmatmul.mubr.bf16.gmra.mrb[0].mxu0 %v1443
          %v1686 = vpop.f32.mrb[0].mxu0
          %v1687 = vadd.f32 0.0, %v1686
          %v1688 = vpop.f32.mrb[0].mxu0
          %v1689 = vpop.f32.mrb[0].mxu0
          %v1690 = vadd.f32 0.0, %v1689
          %v1691 = vpop.f32.mrb[0].mxu0
          %1692 = vmatprep.mubr.bf16.mxu0 0
          %1693 = vmatmul.mubr.bf16.gmra.mrb[0].mxu0 %v1446
          %v1694 = vpop.f32.mrb[0].mxu0
          %v1695 = vadd.f32 0.0, %v1694
          %v1696 = vpop.f32.mrb[0].mxu0
          %v1697 = vpop.f32.mrb[0].mxu0
          %v1698 = vadd.f32 0.0, %v1697
          %v1699 = vpop.f32.mrb[0].mxu0
          %1700 = vmatprep.mubr.bf16.mxu0 0
          %1701 = vmatmul.mubr.bf16.gmra.mrb[0].mxu0 %v1449
          %v1702 = vpop.f32.mrb[0].mxu0
          %v1703 = vadd.f32 0.0, %v1702
          %v1704 = vpop.f32.mrb[0].mxu0
          %v1705 = vpop.f32.mrb[0].mxu0
          %v1706 = vadd.f32 0.0, %v1705
          %v1707 = vpop.f32.mrb[0].mxu0
          %1708 = vmatprep.mubr.bf16.mxu0 0
          %1709 = vmatmul.mubr.bf16.gmra.mrb[0].mxu0 %v1452
          %v1710 = vpop.f32.mrb[0].mxu0
          %v1711 = vadd.f32 0.0, %v1710
          %v1712 = vpop.f32.mrb[0].mxu0
          %v1713 = vpop.f32.mrb[0].mxu0
          %v1714 = vadd.f32 0.0, %v1713
          %v1715 = vpop.f32.mrb[0].mxu0
          %1716 = vmatprep.mubr.bf16.mxu0 0
          %1717 = vmatmul.mubr.bf16.gmra.mrb[0].mxu0 %v1455
          %v1718 = vpop.f32.mrb[0].mxu0
          %v1719 = vadd.f32 0.0, %v1718
          %v1720 = vpop.f32.mrb[0].mxu0
          %v1721 = vpop.f32.mrb[0].mxu0
          %v1722 = vadd.f32 0.0, %v1721
          %v1723 = vpop.f32.mrb[0].mxu0
          %1724 = vmatprep.mubr.bf16.mxu0 0
          %1725 = vmatmul.mubr.bf16.gmra.mrb[0].mxu0 %v1458
          %v1726 = vpop.f32.mrb[0].mxu0
          %v1727 = vadd.f32 0.0, %v1726
          %v1728 = vpop.f32.mrb[0].mxu0
          %v1729 = vpop.f32.mrb[0].mxu0
          %v1730 = vadd.f32 0.0, %v1729
          %v1731 = vpop.f32.mrb[0].mxu0
          %1732 = vmatprep.mubr.bf16.mxu0 0
          %1733 = vmatmul.mubr.bf16.gmra.mrb[0].mxu0 %v1461
          %v1734 = vpop.f32.mrb[0].mxu0
          %v1735 = vadd.f32 0.0, %v1734
          %v1736 = vpop.f32.mrb[0].mxu0
          %v1737 = vpop.f32.mrb[0].mxu0
          %v1738 = vadd.f32 0.0, %v1737
          %v1739 = vpop.f32.mrb[0].mxu0
          %1740 = vmatprep.mubr.bf16.mxu0 0
          %1741 = vmatmul.mubr.bf16.gmra.mrb[0].mxu0 %v1464
          %v1742 = vpop.f32.mrb[0].mxu0
          %v1743 = vadd.f32 0.0, %v1742
          %v1744 = vpop.f32.mrb[0].mxu0
          %v1745 = vpop.f32.mrb[0].mxu0
          %v1746 = vadd.f32 0.0, %v1745
          %v1747 = vpop.f32.mrb[0].mxu0
          %1748 = vmatprep.mubr.bf16.mxu0 0
          %1749 = vmatmul.mubr.bf16.gmra.mrb[0].mxu0 %v1467
          %v1750 = vpop.f32.mrb[0].mxu0
          %v1751 = vadd.f32 0.0, %v1750
          %v1752 = vpop.f32.mrb[0].mxu0
          %v1753 = vpop.f32.mrb[0].mxu0
          %v1754 = vadd.f32 0.0, %v1753
          %v1755 = vpop.f32.mrb[0].mxu0
          %1756 = vmatprep.mubr.bf16.mxu0 0
          %1757 = vmatmul.mubr.bf16.gmra.mrb[0].mxu0 %v1470
          %v1758 = vpop.f32.mrb[0].mxu0
          %v1759 = vadd.f32 0.0, %v1758
          %v1760 = vpop.f32.mrb[0].mxu0
          %v1761 = vpop.f32.mrb[0].mxu0
          %v1762 = vadd.f32 0.0, %v1761
          %v1763 = vpop.f32.mrb[0].mxu0
          %1764 = vdwg.mxu0
          %v1765 = vadd.f32 %v1243, %v1511
          %v1766 = vadd.f32 %v1244, %v1514
          %v1767 = vadd.f32 %v1245, %v1519
          %v1768 = vadd.f32 %v1246, %v1522
          %v1769 = vadd.f32 %v1247, %v1527
          %v1770 = vadd.f32 %v1248, %v1530
          %v1771 = vadd.f32 %v1249, %v1535
          %v1772 = vadd.f32 %v1250, %v1538
          %v1773 = vadd.f32 %v1251, %v1543
          %v1774 = vadd.f32 %v1252, %v1546
          %v1775 = vadd.f32 %v1253, %v1551
          %v1776 = vadd.f32 %v1254, %v1554
          %v1777 = vadd.f32 %v1255, %v1559
          %v1778 = vadd.f32 %v1256, %v1562
          %v1779 = vadd.f32 %v1257, %v1567
          %v1780 = vadd.f32 %v1258, %v1570
          %v1781 = vadd.f32 %v1259, %v1575
          %v1782 = vadd.f32 %v1260, %v1578
          %v1783 = vadd.f32 %v1261, %v1583
          %v1784 = vadd.f32 %v1262, %v1586
          %v1785 = vadd.f32 %v1263, %v1591
          %v1786 = vadd.f32 %v1264, %v1594
          %v1787 = vadd.f32 %v1265, %v1599
          %v1788 = vadd.f32 %v1266, %v1602
          %v1789 = vadd.f32 %v1267, %v1607
          %v1790 = vadd.f32 %v1268, %v1610
          %v1791 = vadd.f32 %v1269, %v1615
          %v1792 = vadd.f32 %v1270, %v1618
          %v1793 = vadd.f32 %v1271, %v1623
          %v1794 = vadd.f32 %v1272, %v1626
          %v1795 = vadd.f32 %v1273, %v1631
          %v1796 = vadd.f32 %v1274, %v1634
          %v1797 = vadd.f32 %v1275, %v1639
          %v1798 = vadd.f32 %v1276, %v1642
          %v1799 = vadd.f32 %v1277, %v1647
          %v1800 = vadd.f32 %v1278, %v1650
          %v1801 = vadd.f32 %v1279, %v1655
          %v1802 = vadd.f32 %v1280, %v1658
          %v1803 = vadd.f32 %v1281, %v1663
          %v1804 = vadd.f32 %v1282, %v1666
          %v1805 = vadd.f32 %v1283, %v1671
          %v1806 = vadd.f32 %v1284, %v1674
          %v1807 = vadd.f32 %v1285, %v1679
          %v1808 = vadd.f32 %v1286, %v1682
          %v1809 = vadd.f32 %v1287, %v1687
          %v1810 = vadd.f32 %v1288, %v1690
          %v1811 = vadd.f32 %v1289, %v1695
          %v1812 = vadd.f32 %v1290, %v1698
          %v1813 = vadd.f32 %v1291, %v1703
          %v1814 = vadd.f32 %v1292, %v1706
          %v1815 = vadd.f32 %v1293, %v1711
          %v1816 = vadd.f32 %v1294, %v1714
          %v1817 = vadd.f32 %v1295, %v1719
          %v1818 = vadd.f32 %v1296, %v1722
          %v1819 = vadd.f32 %v1297, %v1727
          %v1820 = vadd.f32 %v1298, %v1730
          %v1821 = vadd.f32 %v1299, %v1735
          %v1822 = vadd.f32 %v1300, %v1738
          %v1823 = vadd.f32 %v1301, %v1743
          %v1824 = vadd.f32 %v1302, %v1746
          %v1825 = vadd.f32 %v1303, %v1751
          %v1826 = vadd.f32 %v1304, %v1754
          %v1827 = vadd.f32 %v1305, %v1759
          %v1828 = vadd.f32 %v1306, %v1762
          %1829 = vst [vmem:[#allocation3] sm:$0xff] %v1765
          %1830 = vst [vmem:[#allocation3 + $0x8] sm:$0xff] %v1766
          %1831 = vst [vmem:[#allocation3 + $0x10] sm:$0xff] %v1767
          %1832 = vst [vmem:[#allocation3 + $0x18] sm:$0xff] %v1768
          %1833 = vst [vmem:[#allocation3 + $0x20] sm:$0xff] %v1769
          %1834 = vst [vmem:[#allocation3 + $0x28] sm:$0xff] %v1770
          %1835 = vst [vmem:[#allocation3 + $0x30] sm:$0xff] %v1771
          %1836 = vst [vmem:[#allocation3 + $0x38] sm:$0xff] %v1772
          %1837 = vst [vmem:[#allocation3 + $0x40] sm:$0xff] %v1773
          %1838 = vst [vmem:[#allocation3 + $0x48] sm:$0xff] %v1774
          %1839 = vst [vmem:[#allocation3 + $0x50] sm:$0xff] %v1775
          %1840 = vst [vmem:[#allocation3 + $0x58] sm:$0xff] %v1776
          %1841 = vst [vmem:[#allocation3 + $0x60] sm:$0xff] %v1777
          %1842 = vst [vmem:[#allocation3 + $0x68] sm:$0xff] %v1778
          %1843 = vst [vmem:[#allocation3 + $0x70] sm:$0xff] %v1779
          %1844 = vst [vmem:[#allocation3 + $0x78] sm:$0xff] %v1780
          %1845 = vst [vmem:[#allocation3 + $0x80] sm:$0xff] %v1781
          %1846 = vst [vmem:[#allocation3 + $0x88] sm:$0xff] %v1782
          %1847 = vst [vmem:[#allocation3 + $0x90] sm:$0xff] %v1783
          %1848 = vst [vmem:[#allocation3 + $0x98] sm:$0xff] %v1784
          %1849 = vst [vmem:[#allocation3 + $0xa0] sm:$0xff] %v1785
          %1850 = vst [vmem:[#allocation3 + $0xa8] sm:$0xff] %v1786
          %1851 = vst [vmem:[#allocation3 + $0xb0] sm:$0xff] %v1787
          %1852 = vst [vmem:[#allocation3 + $0xb8] sm:$0xff] %v1788
          %1853 = vst [vmem:[#allocation3 + $0xc0] sm:$0xff] %v1789
          %1854 = vst [vmem:[#allocation3 + $0xc8] sm:$0xff] %v1790
          %1855 = vst [vmem:[#allocation3 + $0xd0] sm:$0xff] %v1791
          %1856 = vst [vmem:[#allocation3 + $0xd8] sm:$0xff] %v1792
          %1857 = vst [vmem:[#allocation3 + $0xe0] sm:$0xff] %v1793
          %1858 = vst [vmem:[#allocation3 + $0xe8] sm:$0xff] %v1794
          %1859 = vst [vmem:[#allocation3 + $0xf0] sm:$0xff] %v1795
          %1860 = vst [vmem:[#allocation3 + $0xf8] sm:$0xff] %v1796
          %1861 = vst [vmem:[#allocation3 + $0x100] sm:$0xff] %v1797
          %1862 = vst [vmem:[#allocation3 + $0x108] sm:$0xff] %v1798
          %1863 = vst [vmem:[#allocation3 + $0x110] sm:$0xff] %v1799
          %1864 = vst [vmem:[#allocation3 + $0x118] sm:$0xff] %v1800
          %1865 = vst [vmem:[#allocation3 + $0x120] sm:$0xff] %v1801
          %1866 = vst [vmem:[#allocation3 + $0x128] sm:$0xff] %v1802
          %1867 = vst [vmem:[#allocation3 + $0x130] sm:$0xff] %v1803
          %1868 = vst [vmem:[#allocation3 + $0x138] sm:$0xff] %v1804
          %1869 = vst [vmem:[#allocation3 + $0x140] sm:$0xff] %v1805
          %1870 = vst [vmem:[#allocation3 + $0x148] sm:$0xff] %v1806
          %1871 = vst [vmem:[#allocation3 + $0x150] sm:$0xff] %v1807
          %1872 = vst [vmem:[#allocation3 + $0x158] sm:$0xff] %v1808
          %1873 = vst [vmem:[#allocation3 + $0x160] sm:$0xff] %v1809
          %1874 = vst [vmem:[#allocation3 + $0x168] sm:$0xff] %v1810
          %1875 = vst [vmem:[#allocation3 + $0x170] sm:$0xff] %v1811
          %1876 = vst [vmem:[#allocation3 + $0x178] sm:$0xff] %v1812
          %1877 = vst [vmem:[#allocation3 + $0x180] sm:$0xff] %v1813
          %1878 = vst [vmem:[#allocation3 + $0x188] sm:$0xff] %v1814
          %1879 = vst [vmem:[#allocation3 + $0x190] sm:$0xff] %v1815
          %1880 = vst [vmem:[#allocation3 + $0x198] sm:$0xff] %v1816
          %1881 = vst [vmem:[#allocation3 + $0x1a0] sm:$0xff] %v1817
          %1882 = vst [vmem:[#allocation3 + $0x1a8] sm:$0xff] %v1818
          %1883 = vst [vmem:[#allocation3 + $0x1b0] sm:$0xff] %v1819
          %1884 = vst [vmem:[#allocation3 + $0x1b8] sm:$0xff] %v1820
          %1885 = vst [vmem:[#allocation3 + $0x1c0] sm:$0xff] %v1821
          %1886 = vst [vmem:[#allocation3 + $0x1c8] sm:$0xff] %v1822
          %1887 = vst [vmem:[#allocation3 + $0x1d0] sm:$0xff] %v1823
          %1888 = vst [vmem:[#allocation3 + $0x1d8] sm:$0xff] %v1824
          %1889 = vst [vmem:[#allocation3 + $0x1e0] sm:$0xff] %v1825
          %1890 = vst [vmem:[#allocation3 + $0x1e8] sm:$0xff] %v1826
          %1891 = vst [vmem:[#allocation3 + $0x1f0] sm:$0xff] %v1827
          %1892 = vst [vmem:[#allocation3 + $0x1f8] sm:$0xff] %v1828
          // Predicated region
          $region61: #{tpu_custom_call.1} parent=59 // pred_check
            %p1893 = pneg %p245
          $region62: #{tpu_custom_call.1} parent=59 // pred_check_branch
            %1895 = sbr.rel (%p1893) target = $region64
          $region63: #{tpu_custom_call.1} parent=59 // pred_region
            %v1896 = vld [vmem:[#allocation3] sm:$0xff]
            %v1897 = vld [vmem:[#allocation3 + $0x8] sm:$0xff]
            %v1898 = vld [vmem:[#allocation3 + $0x10] sm:$0xff]
            %v1899 = vld [vmem:[#allocation3 + $0x18] sm:$0xff]
            %v1900 = vld [vmem:[#allocation3 + $0x20] sm:$0xff]
            %v1901 = vld [vmem:[#allocation3 + $0x28] sm:$0xff]
            %v1902 = vld [vmem:[#allocation3 + $0x30] sm:$0xff]
            %v1903 = vld [vmem:[#allocation3 + $0x38] sm:$0xff]
            %v1904 = vld [vmem:[#allocation3 + $0x40] sm:$0xff]
            %v1905 = vld [vmem:[#allocation3 + $0x48] sm:$0xff]
            %v1906 = vld [vmem:[#allocation3 + $0x50] sm:$0xff]
            %v1907 = vld [vmem:[#allocation3 + $0x58] sm:$0xff]
            %v1908 = vld [vmem:[#allocation3 + $0x60] sm:$0xff]
            %v1909 = vld [vmem:[#allocation3 + $0x68] sm:$0xff]
            %v1910 = vld [vmem:[#allocation3 + $0x70] sm:$0xff]
            %v1911 = vld [vmem:[#allocation3 + $0x78] sm:$0xff]
            %v1912 = vld [vmem:[#allocation3 + $0x80] sm:$0xff]
            %v1913 = vld [vmem:[#allocation3 + $0x88] sm:$0xff]
            %v1914 = vld [vmem:[#allocation3 + $0x90] sm:$0xff]
            %v1915 = vld [vmem:[#allocation3 + $0x98] sm:$0xff]
            %v1916 = vld [vmem:[#allocation3 + $0xa0] sm:$0xff]
            %v1917 = vld [vmem:[#allocation3 + $0xa8] sm:$0xff]
            %v1918 = vld [vmem:[#allocation3 + $0xb0] sm:$0xff]
            %v1919 = vld [vmem:[#allocation3 + $0xb8] sm:$0xff]
            %v1920 = vld [vmem:[#allocation3 + $0xc0] sm:$0xff]
            %v1921 = vld [vmem:[#allocation3 + $0xc8] sm:$0xff]
            %v1922 = vld [vmem:[#allocation3 + $0xd0] sm:$0xff]
            %v1923 = vld [vmem:[#allocation3 + $0xd8] sm:$0xff]
            %v1924 = vld [vmem:[#allocation3 + $0xe0] sm:$0xff]
            %v1925 = vld [vmem:[#allocation3 + $0xe8] sm:$0xff]
            %v1926 = vld [vmem:[#allocation3 + $0xf0] sm:$0xff]
            %v1927 = vld [vmem:[#allocation3 + $0xf8] sm:$0xff]
            %v1928 = vld [vmem:[#allocation3 + $0x100] sm:$0xff]
            %v1929 = vld [vmem:[#allocation3 + $0x108] sm:$0xff]
            %v1930 = vld [vmem:[#allocation3 + $0x110] sm:$0xff]
            %v1931 = vld [vmem:[#allocation3 + $0x118] sm:$0xff]
            %v1932 = vld [vmem:[#allocation3 + $0x120] sm:$0xff]
            %v1933 = vld [vmem:[#allocation3 + $0x128] sm:$0xff]
            %v1934 = vld [vmem:[#allocation3 + $0x130] sm:$0xff]
            %v1935 = vld [vmem:[#allocation3 + $0x138] sm:$0xff]
            %v1936 = vld [vmem:[#allocation3 + $0x140] sm:$0xff]
            %v1937 = vld [vmem:[#allocation3 + $0x148] sm:$0xff]
            %v1938 = vld [vmem:[#allocation3 + $0x150] sm:$0xff]
            %v1939 = vld [vmem:[#allocation3 + $0x158] sm:$0xff]
            %v1940 = vld [vmem:[#allocation3 + $0x160] sm:$0xff]
            %v1941 = vld [vmem:[#allocation3 + $0x168] sm:$0xff]
            %v1942 = vld [vmem:[#allocation3 + $0x170] sm:$0xff]
            %v1943 = vld [vmem:[#allocation3 + $0x178] sm:$0xff]
            %v1944 = vld [vmem:[#allocation3 + $0x180] sm:$0xff]
            %v1945 = vld [vmem:[#allocation3 + $0x188] sm:$0xff]
            %v1946 = vld [vmem:[#allocation3 + $0x190] sm:$0xff]
            %v1947 = vld [vmem:[#allocation3 + $0x198] sm:$0xff]
            %v1948 = vld [vmem:[#allocation3 + $0x1a0] sm:$0xff]
            %v1949 = vld [vmem:[#allocation3 + $0x1a8] sm:$0xff]
            %v1950 = vld [vmem:[#allocation3 + $0x1b0] sm:$0xff]
            %v1951 = vld [vmem:[#allocation3 + $0x1b8] sm:$0xff]
            %v1952 = vld [vmem:[#allocation3 + $0x1c0] sm:$0xff]
            %v1953 = vld [vmem:[#allocation3 + $0x1c8] sm:$0xff]
            %v1954 = vld [vmem:[#allocation3 + $0x1d0] sm:$0xff]
            %v1955 = vld [vmem:[#allocation3 + $0x1d8] sm:$0xff]
            %v1956 = vld [vmem:[#allocation3 + $0x1e0] sm:$0xff]
            %v1957 = vld [vmem:[#allocation3 + $0x1e8] sm:$0xff]
            %v1958 = vld [vmem:[#allocation3 + $0x1f0] sm:$0xff]
            %v1959 = vld [vmem:[#allocation3 + $0x1f8] sm:$0xff]
            %v1960 = vpack.c.bf16 %v1897, %v1896
            %v1961 = vpack.c.bf16 %v1899, %v1898
            %v1962 = vpack.c.bf16 %v1901, %v1900
            %v1963 = vpack.c.bf16 %v1903, %v1902
            %v1964 = vpack.c.bf16 %v1905, %v1904
            %v1965 = vpack.c.bf16 %v1907, %v1906
            %v1966 = vpack.c.bf16 %v1909, %v1908
            %v1967 = vpack.c.bf16 %v1911, %v1910
            %v1968 = vpack.c.bf16 %v1913, %v1912
            %v1969 = vpack.c.bf16 %v1915, %v1914
            %v1970 = vpack.c.bf16 %v1917, %v1916
            %v1971 = vpack.c.bf16 %v1919, %v1918
            %v1972 = vpack.c.bf16 %v1921, %v1920
            %v1973 = vpack.c.bf16 %v1923, %v1922
            %v1974 = vpack.c.bf16 %v1925, %v1924
            %v1975 = vpack.c.bf16 %v1927, %v1926
            %v1976 = vpack.c.bf16 %v1929, %v1928
            %v1977 = vpack.c.bf16 %v1931, %v1930
            %v1978 = vpack.c.bf16 %v1933, %v1932
            %v1979 = vpack.c.bf16 %v1935, %v1934
            %v1980 = vpack.c.bf16 %v1937, %v1936
            %v1981 = vpack.c.bf16 %v1939, %v1938
            %v1982 = vpack.c.bf16 %v1941, %v1940
            %v1983 = vpack.c.bf16 %v1943, %v1942
            %v1984 = vpack.c.bf16 %v1945, %v1944
            %v1985 = vpack.c.bf16 %v1947, %v1946
            %v1986 = vpack.c.bf16 %v1949, %v1948
            %v1987 = vpack.c.bf16 %v1951, %v1950
            %v1988 = vpack.c.bf16 %v1953, %v1952
            %v1989 = vpack.c.bf16 %v1955, %v1954
            %v1990 = vpack.c.bf16 %v1957, %v1956
            %v1991 = vpack.c.bf16 %v1959, %v1958
            %1992 = vst [vmem:[#allocation4] sm:$0xff] %v1960
            %1993 = vst [vmem:[#allocation4 + $0x8] sm:$0xff] %v1961
            %1994 = vst [vmem:[#allocation4 + $0x10] sm:$0xff] %v1962
            %1995 = vst [vmem:[#allocation4 + $0x18] sm:$0xff] %v1963
            %1996 = vst [vmem:[#allocation4 + $0x20] sm:$0xff] %v1964
            %1997 = vst [vmem:[#allocation4 + $0x28] sm:$0xff] %v1965
            %1998 = vst [vmem:[#allocation4 + $0x30] sm:$0xff] %v1966
            %1999 = vst [vmem:[#allocation4 + $0x38] sm:$0xff] %v1967
            %2000 = vst [vmem:[#allocation4 + $0x40] sm:$0xff] %v1968
            %2001 = vst [vmem:[#allocation4 + $0x48] sm:$0xff] %v1969
            %2002 = vst [vmem:[#allocation4 + $0x50] sm:$0xff] %v1970
            %2003 = vst [vmem:[#allocation4 + $0x58] sm:$0xff] %v1971
            %2004 = vst [vmem:[#allocation4 + $0x60] sm:$0xff] %v1972
            %2005 = vst [vmem:[#allocation4 + $0x68] sm:$0xff] %v1973
            %2006 = vst [vmem:[#allocation4 + $0x70] sm:$0xff] %v1974
            %2007 = vst [vmem:[#allocation4 + $0x78] sm:$0xff] %v1975
            %2008 = vst [vmem:[#allocation4 + $0x80] sm:$0xff] %v1976
            %2009 = vst [vmem:[#allocation4 + $0x88] sm:$0xff] %v1977
            %2010 = vst [vmem:[#allocation4 + $0x90] sm:$0xff] %v1978
            %2011 = vst [vmem:[#allocation4 + $0x98] sm:$0xff] %v1979
            %2012 = vst [vmem:[#allocation4 + $0xa0] sm:$0xff] %v1980
            %2013 = vst [vmem:[#allocation4 + $0xa8] sm:$0xff] %v1981
            %2014 = vst [vmem:[#allocation4 + $0xb0] sm:$0xff] %v1982
            %2015 = vst [vmem:[#allocation4 + $0xb8] sm:$0xff] %v1983
            %2016 = vst [vmem:[#allocation4 + $0xc0] sm:$0xff] %v1984
            %2017 = vst [vmem:[#allocation4 + $0xc8] sm:$0xff] %v1985
            %2018 = vst [vmem:[#allocation4 + $0xd0] sm:$0xff] %v1986
            %2019 = vst [vmem:[#allocation4 + $0xd8] sm:$0xff] %v1987
            %2020 = vst [vmem:[#allocation4 + $0xe0] sm:$0xff] %v1988
            %2021 = vst [vmem:[#allocation4 + $0xe8] sm:$0xff] %v1989
            %2022 = vst [vmem:[#allocation4 + $0xf0] sm:$0xff] %v1990
            %2023 = vst [vmem:[#allocation4 + $0xf8] sm:$0xff] %v1991
          $region64: #{tpu_custom_call.1} parent=59 // pred_fallthru
            _
        $region60: #{tpu_custom_call.1} parent=35 // pred_fallthru
          _
        %p2024 = scmp.eq.s32.totalorder %s24, 2
        // Predicated region
        $region65: #{tpu_custom_call.1} parent=35 // pred_check
          %p2025 = pneg %p2024
        $region66: #{tpu_custom_call.1} parent=35 // pred_check_branch
          %2027 = sbr.rel (%p2025) target = $region68
        $region67: #{tpu_custom_call.1} parent=35 // pred_region
          %v2028 = vld [vmem:[#allocation2] sm:$0xf]
          %v2030 = vlaneseq
          %v2031 = vshrl.u32 %v2030, 7
          %v2032 = vsub.s32 0, %v2031
          %v2033 = vrot.slane %v2028, %v2032
          %v2034 = vlaneseq
          %v2035 = vshrl.u32 %v2034, 7
          %v2036 = vsub.s32 1, %v2035
          %v2037 = vrot.slane %v2028, %v2036
          %v2038 = vlaneseq
          %v2039 = vshrl.u32 %v2038, 7
          %v2040 = vsub.s32 2, %v2039
          %v2041 = vrot.slane %v2028, %v2040
          %v2042 = vlaneseq
          %v2043 = vshrl.u32 %v2042, 7
          %v2044 = vsub.s32 3, %v2043
          %v2045 = vrot.slane %v2028, %v2044
          %v2050 = vmul.f32 %v797, %v2033
          %v2051 = vmul.f32 %v798, %v2037
          %v2052 = vmul.f32 %v799, %v2041
          %v2053 = vmul.f32 %v800, %v2045
          %v2054 = vadd.f32 %v2050, %v2051
          %v2055 = vadd.f32 %v2054, %v2052
          %v2056 = vadd.f32 %v2055, %v2053
          %2057 = vadd.xlane.f32.xlu0 %v2056
          %v2058 = vpop.xlane.xlu0 %2057
          %v2059 = vadd.f32 %v2058, 1.0
          %v2060 = vmax.f32 %v2059, 1e-06
          %v2061 = vrsqrt.pop %v2060
          %v2062 = vpack.c.bf16 %v782, %v782
          %v2063 = vpack.c.bf16 %v783, %v783
          %v2064 = vpack.c.bf16 %v784, %v784
          %v2065 = vpack.c.bf16 %v785, %v785
          %v2066 = vld [vmem:[#allocation10] sm:$0xf]
          %v2067 = vld [vmem:[#allocation10 + $0x4] sm:$0xf]
          %v2068 = vld [vmem:[#allocation10 + $0x8] sm:$0xf]
          %v2069 = vld [vmem:[#allocation10 + $0xc] sm:$0xf]
          %v2070 = vld [vmem:[#allocation10 + $0x10] sm:$0xf]
          %v2071 = vld [vmem:[#allocation10 + $0x14] sm:$0xf]
          %v2072 = vld [vmem:[#allocation10 + $0x18] sm:$0xf]
          %v2073 = vld [vmem:[#allocation10 + $0x1c] sm:$0xf]
          %v2074 = vld [vmem:[#allocation10 + $0x20] sm:$0xf]
          %v2075 = vld [vmem:[#allocation10 + $0x24] sm:$0xf]
          %v2076 = vld [vmem:[#allocation10 + $0x28] sm:$0xf]
          %v2077 = vld [vmem:[#allocation10 + $0x2c] sm:$0xf]
          %v2078 = vld [vmem:[#allocation10 + $0x30] sm:$0xf]
          %v2079 = vld [vmem:[#allocation10 + $0x34] sm:$0xf]
          %v2080 = vld [vmem:[#allocation10 + $0x38] sm:$0xf]
          %v2081 = vld [vmem:[#allocation10 + $0x3c] sm:$0xf]
          %v2082 = vld [vmem:[#allocation10 + $0x40] sm:$0xf]
          %v2083 = vld [vmem:[#allocation10 + $0x44] sm:$0xf]
          %v2084 = vld [vmem:[#allocation10 + $0x48] sm:$0xf]
          %v2085 = vld [vmem:[#allocation10 + $0x4c] sm:$0xf]
          %v2086 = vld [vmem:[#allocation10 + $0x50] sm:$0xf]
          %v2087 = vld [vmem:[#allocation10 + $0x54] sm:$0xf]
          %v2088 = vld [vmem:[#allocation10 + $0x58] sm:$0xf]
          %v2089 = vld [vmem:[#allocation10 + $0x5c] sm:$0xf]
          %v2090 = vld [vmem:[#allocation10 + $0x60] sm:$0xf]
          %v2091 = vld [vmem:[#allocation10 + $0x64] sm:$0xf]
          %v2092 = vld [vmem:[#allocation10 + $0x68] sm:$0xf]
          %v2093 = vld [vmem:[#allocation10 + $0x6c] sm:$0xf]
          %v2094 = vld [vmem:[#allocation10 + $0x70] sm:$0xf]
          %v2095 = vld [vmem:[#allocation10 + $0x74] sm:$0xf]
          %v2096 = vld [vmem:[#allocation10 + $0x78] sm:$0xf]
          %v2097 = vld [vmem:[#allocation10 + $0x7c] sm:$0xf]
          %v2098 = vld [vmem:[#allocation10 + $0x80] sm:$0xf]
          %v2099 = vld [vmem:[#allocation10 + $0x84] sm:$0xf]
          %v2100 = vld [vmem:[#allocation10 + $0x88] sm:$0xf]
          %v2101 = vld [vmem:[#allocation10 + $0x8c] sm:$0xf]
          %v2102 = vld [vmem:[#allocation10 + $0x90] sm:$0xf]
          %v2103 = vld [vmem:[#allocation10 + $0x94] sm:$0xf]
          %v2104 = vld [vmem:[#allocation10 + $0x98] sm:$0xf]
          %v2105 = vld [vmem:[#allocation10 + $0x9c] sm:$0xf]
          %v2106 = vld [vmem:[#allocation10 + $0xa0] sm:$0xf]
          %v2107 = vld [vmem:[#allocation10 + $0xa4] sm:$0xf]
          %v2108 = vld [vmem:[#allocation10 + $0xa8] sm:$0xf]
          %v2109 = vld [vmem:[#allocation10 + $0xac] sm:$0xf]
          %v2110 = vld [vmem:[#allocation10 + $0xb0] sm:$0xf]
          %v2111 = vld [vmem:[#allocation10 + $0xb4] sm:$0xf]
          %v2112 = vld [vmem:[#allocation10 + $0xb8] sm:$0xf]
          %v2113 = vld [vmem:[#allocation10 + $0xbc] sm:$0xf]
          %v2114 = vld [vmem:[#allocation10 + $0xc0] sm:$0xf]
          %v2115 = vld [vmem:[#allocation10 + $0xc4] sm:$0xf]
          %v2116 = vld [vmem:[#allocation10 + $0xc8] sm:$0xf]
          %v2117 = vld [vmem:[#allocation10 + $0xcc] sm:$0xf]
          %v2118 = vld [vmem:[#allocation10 + $0xd0] sm:$0xf]
          %v2119 = vld [vmem:[#allocation10 + $0xd4] sm:$0xf]
          %v2120 = vld [vmem:[#allocation10 + $0xd8] sm:$0xf]
          %v2121 = vld [vmem:[#allocation10 + $0xdc] sm:$0xf]
          %v2122 = vld [vmem:[#allocation10 + $0xe0] sm:$0xf]
          %v2123 = vld [vmem:[#allocation10 + $0xe4] sm:$0xf]
          %v2124 = vld [vmem:[#allocation10 + $0xe8] sm:$0xf]
          %v2125 = vld [vmem:[#allocation10 + $0xec] sm:$0xf]
          %v2126 = vld [vmem:[#allocation10 + $0xf0] sm:$0xf]
          %v2127 = vld [vmem:[#allocation10 + $0xf4] sm:$0xf]
          %v2128 = vld [vmem:[#allocation10 + $0xf8] sm:$0xf]
          %v2129 = vld [vmem:[#allocation10 + $0xfc] sm:$0xf]
          %v2194 = vunpack.c.l.b16 %v2066
          %v2195 = vunpack.c.l.b16 %v2067
          %v2196 = vunpack.c.l.b16 %v2068
          %v2197 = vunpack.c.l.b16 %v2069
          %v2198 = vunpack.c.l.b16 %v2070
          %v2199 = vunpack.c.l.b16 %v2071
          %v2200 = vunpack.c.l.b16 %v2072
          %v2201 = vunpack.c.l.b16 %v2073
          %v2202 = vunpack.c.l.b16 %v2074
          %v2203 = vunpack.c.l.b16 %v2075
          %v2204 = vunpack.c.l.b16 %v2076
          %v2205 = vunpack.c.l.b16 %v2077
          %v2206 = vunpack.c.l.b16 %v2078
          %v2207 = vunpack.c.l.b16 %v2079
          %v2208 = vunpack.c.l.b16 %v2080
          %v2209 = vunpack.c.l.b16 %v2081
          %v2210 = vunpack.c.l.b16 %v2082
          %v2211 = vunpack.c.l.b16 %v2083
          %v2212 = vunpack.c.l.b16 %v2084
          %v2213 = vunpack.c.l.b16 %v2085
          %v2214 = vunpack.c.l.b16 %v2086
          %v2215 = vunpack.c.l.b16 %v2087
          %v2216 = vunpack.c.l.b16 %v2088
          %v2217 = vunpack.c.l.b16 %v2089
          %v2218 = vunpack.c.l.b16 %v2090
          %v2219 = vunpack.c.l.b16 %v2091
          %v2220 = vunpack.c.l.b16 %v2092
          %v2221 = vunpack.c.l.b16 %v2093
          %v2222 = vunpack.c.l.b16 %v2094
          %v2223 = vunpack.c.l.b16 %v2095
          %v2224 = vunpack.c.l.b16 %v2096
          %v2225 = vunpack.c.l.b16 %v2097
          %v2226 = vunpack.c.l.b16 %v2098
          %v2227 = vunpack.c.l.b16 %v2099
          %v2228 = vunpack.c.l.b16 %v2100
          %v2229 = vunpack.c.l.b16 %v2101
          %v2230 = vunpack.c.l.b16 %v2102
          %v2231 = vunpack.c.l.b16 %v2103
          %v2232 = vunpack.c.l.b16 %v2104
          %v2233 = vunpack.c.l.b16 %v2105
          %v2234 = vunpack.c.l.b16 %v2106
          %v2235 = vunpack.c.l.b16 %v2107
          %v2236 = vunpack.c.l.b16 %v2108
          %v2237 = vunpack.c.l.b16 %v2109
          %v2238 = vunpack.c.l.b16 %v2110
          %v2239 = vunpack.c.l.b16 %v2111
          %v2240 = vunpack.c.l.b16 %v2112
          %v2241 = vunpack.c.l.b16 %v2113
          %v2242 = vunpack.c.l.b16 %v2114
          %v2243 = vunpack.c.l.b16 %v2115
          %v2244 = vunpack.c.l.b16 %v2116
          %v2245 = vunpack.c.l.b16 %v2117
          %v2246 = vunpack.c.l.b16 %v2118
          %v2247 = vunpack.c.l.b16 %v2119
          %v2248 = vunpack.c.l.b16 %v2120
          %v2249 = vunpack.c.l.b16 %v2121
          %v2250 = vunpack.c.l.b16 %v2122
          %v2251 = vunpack.c.l.b16 %v2123
          %v2252 = vunpack.c.l.b16 %v2124
          %v2253 = vunpack.c.l.b16 %v2125
          %v2254 = vunpack.c.l.b16 %v2126
          %v2255 = vunpack.c.l.b16 %v2127
          %v2256 = vunpack.c.l.b16 %v2128
          %v2257 = vunpack.c.l.b16 %v2129
          %v2258 = vpack.c.b16 %v2195, %v2194
          %v2259 = vpack.c.b16 %v2197, %v2196
          %v2260 = vpack.c.b16 %v2199, %v2198
          %v2261 = vpack.c.b16 %v2201, %v2200
          %v2262 = vpack.c.b16 %v2203, %v2202
          %v2263 = vpack.c.b16 %v2205, %v2204
          %v2264 = vpack.c.b16 %v2207, %v2206
          %v2265 = vpack.c.b16 %v2209, %v2208
          %v2266 = vpack.c.b16 %v2211, %v2210
          %v2267 = vpack.c.b16 %v2213, %v2212
          %v2268 = vpack.c.b16 %v2215, %v2214
          %v2269 = vpack.c.b16 %v2217, %v2216
          %v2270 = vpack.c.b16 %v2219, %v2218
          %v2271 = vpack.c.b16 %v2221, %v2220
          %v2272 = vpack.c.b16 %v2223, %v2222
          %v2273 = vpack.c.b16 %v2225, %v2224
          %v2274 = vpack.c.b16 %v2227, %v2226
          %v2275 = vpack.c.b16 %v2229, %v2228
          %v2276 = vpack.c.b16 %v2231, %v2230
          %v2277 = vpack.c.b16 %v2233, %v2232
          %v2278 = vpack.c.b16 %v2235, %v2234
          %v2279 = vpack.c.b16 %v2237, %v2236
          %v2280 = vpack.c.b16 %v2239, %v2238
          %v2281 = vpack.c.b16 %v2241, %v2240
          %v2282 = vpack.c.b16 %v2243, %v2242
          %v2283 = vpack.c.b16 %v2245, %v2244
          %v2284 = vpack.c.b16 %v2247, %v2246
          %v2285 = vpack.c.b16 %v2249, %v2248
          %v2286 = vpack.c.b16 %v2251, %v2250
          %v2287 = vpack.c.b16 %v2253, %v2252
          %v2288 = vpack.c.b16 %v2255, %v2254
          %v2289 = vpack.c.b16 %v2257, %v2256
          %2322 = vmatprep.subr.bf16.mxu0 0
          %2323 = vmatpush1.bf16.msra.mxu0 %v2258
          %2324 = vmatprep.subr.bf16.mxu0 0
          %2325 = vmatpush1.bf16.msra.mxu0 %v2259
          %2326 = vmatprep.subr.bf16.mxu0 0
          %2327 = vmatpush1.bf16.msra.mxu0 %v2260
          %2328 = vmatprep.subr.bf16.mxu0 0
          %2329 = vmatpush1.bf16.msra.mxu0 %v2261
          %2330 = vmatprep.subr.bf16.mxu0 0
          %2331 = vmatpush1.bf16.msra.mxu0 %v2262
          %2332 = vmatprep.subr.bf16.mxu0 0
          %2333 = vmatpush1.bf16.msra.mxu0 %v2263
          %2334 = vmatprep.subr.bf16.mxu0 0
          %2335 = vmatpush1.bf16.msra.mxu0 %v2264
          %2336 = vmatprep.subr.bf16.mxu0 0
          %2337 = vmatpush1.bf16.msra.mxu0 %v2265
          %2338 = vmatprep.subr.bf16.mxu0 0
          %2339 = vmatpush1.bf16.msra.mxu0 %v2266
          %2340 = vmatprep.subr.bf16.mxu0 0
          %2341 = vmatpush1.bf16.msra.mxu0 %v2267
          %2342 = vmatprep.subr.bf16.mxu0 0
          %2343 = vmatpush1.bf16.msra.mxu0 %v2268
          %2344 = vmatprep.subr.bf16.mxu0 0
          %2345 = vmatpush1.bf16.msra.mxu0 %v2269
          %2346 = vmatprep.subr.bf16.mxu0 0
          %2347 = vmatpush1.bf16.msra.mxu0 %v2270
          %2348 = vmatprep.subr.bf16.mxu0 0
          %2349 = vmatpush1.bf16.msra.mxu0 %v2271
          %2350 = vmatprep.subr.bf16.mxu0 0
          %2351 = vmatpush1.bf16.msra.mxu0 %v2272
          %2352 = vmatprep.subr.bf16.mxu0 0
          %2353 = vmatpush1.bf16.msra.mxu0 %v2273
          %2354 = vmatprep.mubr.bf16.mxu0 %v2063
          %2355 = vmatmul.mubr.bf16.gmra.mrb[0].mxu0 %v2062
          %v2356 = vpop.f32.mrb[0].mxu0
          %v2357 = vadd.f32 0.0, %v2356
          %v2358 = vpop.f32.mrb[0].mxu0
          %v2359 = vpop.f32.mrb[0].mxu0
          %v2360 = vpop.f32.mrb[0].mxu0
          %2361 = vdwg.mxu0
          %2362 = vmatprep.subr.bf16.mxu0 0
          %2363 = vmatpush1.bf16.msra.mxu0 %v2274
          %2364 = vmatprep.subr.bf16.mxu0 0
          %2365 = vmatpush1.bf16.msra.mxu0 %v2275
          %2366 = vmatprep.subr.bf16.mxu0 0
          %2367 = vmatpush1.bf16.msra.mxu0 %v2276
          %2368 = vmatprep.subr.bf16.mxu0 0
          %2369 = vmatpush1.bf16.msra.mxu0 %v2277
          %2370 = vmatprep.subr.bf16.mxu0 0
          %2371 = vmatpush1.bf16.msra.mxu0 %v2278
          %2372 = vmatprep.subr.bf16.mxu0 0
          %2373 = vmatpush1.bf16.msra.mxu0 %v2279
          %2374 = vmatprep.subr.bf16.mxu0 0
          %2375 = vmatpush1.bf16.msra.mxu0 %v2280
          %2376 = vmatprep.subr.bf16.mxu0 0
          %2377 = vmatpush1.bf16.msra.mxu0 %v2281
          %2378 = vmatprep.subr.bf16.mxu0 0
          %2379 = vmatpush1.bf16.msra.mxu0 %v2282
          %2380 = vmatprep.subr.bf16.mxu0 0
          %2381 = vmatpush1.bf16.msra.mxu0 %v2283
          %2382 = vmatprep.subr.bf16.mxu0 0
          %2383 = vmatpush1.bf16.msra.mxu0 %v2284
          %2384 = vmatprep.subr.bf16.mxu0 0
          %2385 = vmatpush1.bf16.msra.mxu0 %v2285
          %2386 = vmatprep.subr.bf16.mxu0 0
          %2387 = vmatpush1.bf16.msra.mxu0 %v2286
          %2388 = vmatprep.subr.bf16.mxu0 0
          %2389 = vmatpush1.bf16.msra.mxu0 %v2287
          %2390 = vmatprep.subr.bf16.mxu0 0
          %2391 = vmatpush1.bf16.msra.mxu0 %v2288
          %2392 = vmatprep.subr.bf16.mxu0 0
          %2393 = vmatpush1.bf16.msra.mxu0 %v2289
          %2394 = vmatprep.mubr.bf16.mxu0 %v2065
          %2395 = vmatmul.mubr.bf16.gmra.mrb[0].mxu0 %v2064
          %v2396 = vpop.f32.mrb[0].mxu0
          %v2397 = vadd.f32 %v2357, %v2396
          %v2398 = vpop.f32.mrb[0].mxu0
          %v2399 = vpop.f32.mrb[0].mxu0
          %v2400 = vpop.f32.mrb[0].mxu0
          %2401 = vdwg.mxu0
          %v2402 = vmul.f32 %v2061, %v2397
          %v2403 = vpack.c.bf16 %v797, %v797
          %v2404 = vpack.c.bf16 %v798, %v798
          %v2405 = vpack.c.bf16 %v799, %v799
          %v2406 = vpack.c.bf16 %v800, %v800
          %v2407 = vld [vmem:[#allocation4] sm:$0xff]
          %v2408 = vld [vmem:[#allocation4 + $0x8] sm:$0xff]
          %v2409 = vld [vmem:[#allocation4 + $0x10] sm:$0xff]
          %v2410 = vld [vmem:[#allocation4 + $0x18] sm:$0xff]
          %v2411 = vld [vmem:[#allocation4 + $0x20] sm:$0xff]
          %v2412 = vld [vmem:[#allocation4 + $0x28] sm:$0xff]
          %v2413 = vld [vmem:[#allocation4 + $0x30] sm:$0xff]
          %v2414 = vld [vmem:[#allocation4 + $0x38] sm:$0xff]
          %v2415 = vld [vmem:[#allocation4 + $0x40] sm:$0xff]
          %v2416 = vld [vmem:[#allocation4 + $0x48] sm:$0xff]
          %v2417 = vld [vmem:[#allocation4 + $0x50] sm:$0xff]
          %v2418 = vld [vmem:[#allocation4 + $0x58] sm:$0xff]
          %v2419 = vld [vmem:[#allocation4 + $0x60] sm:$0xff]
          %v2420 = vld [vmem:[#allocation4 + $0x68] sm:$0xff]
          %v2421 = vld [vmem:[#allocation4 + $0x70] sm:$0xff]
          %v2422 = vld [vmem:[#allocation4 + $0x78] sm:$0xff]
          %v2423 = vld [vmem:[#allocation4 + $0x80] sm:$0xff]
          %v2424 = vld [vmem:[#allocation4 + $0x88] sm:$0xff]
          %v2425 = vld [vmem:[#allocation4 + $0x90] sm:$0xff]
          %v2426 = vld [vmem:[#allocation4 + $0x98] sm:$0xff]
          %v2427 = vld [vmem:[#allocation4 + $0xa0] sm:$0xff]
          %v2428 = vld [vmem:[#allocation4 + $0xa8] sm:$0xff]
          %v2429 = vld [vmem:[#allocation4 + $0xb0] sm:$0xff]
          %v2430 = vld [vmem:[#allocation4 + $0xb8] sm:$0xff]
          %v2431 = vld [vmem:[#allocation4 + $0xc0] sm:$0xff]
          %v2432 = vld [vmem:[#allocation4 + $0xc8] sm:$0xff]
          %v2433 = vld [vmem:[#allocation4 + $0xd0] sm:$0xff]
          %v2434 = vld [vmem:[#allocation4 + $0xd8] sm:$0xff]
          %v2435 = vld [vmem:[#allocation4 + $0xe0] sm:$0xff]
          %v2436 = vld [vmem:[#allocation4 + $0xe8] sm:$0xff]
          %v2437 = vld [vmem:[#allocation4 + $0xf0] sm:$0xff]
          %v2438 = vld [vmem:[#allocation4 + $0xf8] sm:$0xff]
          %2439 = vmatprep.subr.bf16.mxu0 0
          %2440 = vmatpush1.bf16.msra.mxu0 %v2407
          %2441 = vmatprep.subr.bf16.mxu0 0
          %2442 = vmatpush1.bf16.msra.mxu0 %v2408
          %2443 = vmatprep.subr.bf16.mxu0 0
          %2444 = vmatpush1.bf16.msra.mxu0 %v2409
          %2445 = vmatprep.subr.bf16.mxu0 0
          %2446 = vmatpush1.bf16.msra.mxu0 %v2410
          %2447 = vmatprep.subr.bf16.mxu0 0
          %2448 = vmatpush1.bf16.msra.mxu0 %v2411
          %2449 = vmatprep.subr.bf16.mxu0 0
          %2450 = vmatpush1.bf16.msra.mxu0 %v2412
          %2451 = vmatprep.subr.bf16.mxu0 0
          %2452 = vmatpush1.bf16.msra.mxu0 %v2413
          %2453 = vmatprep.subr.bf16.mxu0 0
          %2454 = vmatpush1.bf16.msra.mxu0 %v2414
          %2455 = vmatprep.subr.bf16.mxu0 0
          %2456 = vmatpush1.bf16.msra.mxu0 %v2415
          %2457 = vmatprep.subr.bf16.mxu0 0
          %2458 = vmatpush1.bf16.msra.mxu0 %v2416
          %2459 = vmatprep.subr.bf16.mxu0 0
          %2460 = vmatpush1.bf16.msra.mxu0 %v2417
          %2461 = vmatprep.subr.bf16.mxu0 0
          %2462 = vmatpush1.bf16.msra.mxu0 %v2418
          %2463 = vmatprep.subr.bf16.mxu0 0
          %2464 = vmatpush1.bf16.msra.mxu0 %v2419
          %2465 = vmatprep.subr.bf16.mxu0 0
          %2466 = vmatpush1.bf16.msra.mxu0 %v2420
          %2467 = vmatprep.subr.bf16.mxu0 0
          %2468 = vmatpush1.bf16.msra.mxu0 %v2421
          %2469 = vmatprep.subr.bf16.mxu0 0
          %2470 = vmatpush1.bf16.msra.mxu0 %v2422
          %2471 = vmatprep.mubr.bf16.mxu0 %v2404
          %2472 = vmatmul.mubr.bf16.gmra.mrb[0].mxu0 %v2403
          %v2473 = vpop.f32.mrb[0].mxu0
          %v2474 = vadd.f32 %v2402, %v2473
          %v2475 = vpop.f32.mrb[0].mxu0
          %v2476 = vpop.f32.mrb[0].mxu0
          %v2477 = vpop.f32.mrb[0].mxu0
          %2478 = vdwg.mxu0
          %2479 = vmatprep.subr.bf16.mxu0 0
          %2480 = vmatpush1.bf16.msra.mxu0 %v2423
          %2481 = vmatprep.subr.bf16.mxu0 0
          %2482 = vmatpush1.bf16.msra.mxu0 %v2424
          %2483 = vmatprep.subr.bf16.mxu0 0
          %2484 = vmatpush1.bf16.msra.mxu0 %v2425
          %2485 = vmatprep.subr.bf16.mxu0 0
          %2486 = vmatpush1.bf16.msra.mxu0 %v2426
          %2487 = vmatprep.subr.bf16.mxu0 0
          %2488 = vmatpush1.bf16.msra.mxu0 %v2427
          %2489 = vmatprep.subr.bf16.mxu0 0
          %2490 = vmatpush1.bf16.msra.mxu0 %v2428
          %2491 = vmatprep.subr.bf16.mxu0 0
          %2492 = vmatpush1.bf16.msra.mxu0 %v2429
          %2493 = vmatprep.subr.bf16.mxu0 0
          %2494 = vmatpush1.bf16.msra.mxu0 %v2430
          %2495 = vmatprep.subr.bf16.mxu0 0
          %2496 = vmatpush1.bf16.msra.mxu0 %v2431
          %2497 = vmatprep.subr.bf16.mxu0 0
          %2498 = vmatpush1.bf16.msra.mxu0 %v2432
          %2499 = vmatprep.subr.bf16.mxu0 0
          %2500 = vmatpush1.bf16.msra.mxu0 %v2433
          %2501 = vmatprep.subr.bf16.mxu0 0
          %2502 = vmatpush1.bf16.msra.mxu0 %v2434
          %2503 = vmatprep.subr.bf16.mxu0 0
          %2504 = vmatpush1.bf16.msra.mxu0 %v2435
          %2505 = vmatprep.subr.bf16.mxu0 0
          %2506 = vmatpush1.bf16.msra.mxu0 %v2436
          %2507 = vmatprep.subr.bf16.mxu0 0
          %2508 = vmatpush1.bf16.msra.mxu0 %v2437
          %2509 = vmatprep.subr.bf16.mxu0 0
          %2510 = vmatpush1.bf16.msra.mxu0 %v2438
          %2511 = vmatprep.mubr.bf16.mxu0 %v2406
          %2512 = vmatmul.mubr.bf16.gmra.mrb[0].mxu0 %v2405
          %v2513 = vpop.f32.mrb[0].mxu0
          %v2514 = vadd.f32 %v2474, %v2513
          %v2515 = vpop.f32.mrb[0].mxu0
          %v2516 = vpop.f32.mrb[0].mxu0
          %v2517 = vpop.f32.mrb[0].mxu0
          %2518 = vdwg.mxu0
          %v2519 = vmul.f32 %v2061, %v2514
          %v2520 = vld [vmem:[%s3] sm:$0x1]
          %v2522 = vlaneseq
          %v2523 = vshrl.u32 %v2522, 7
          %v2524 = vsub.s32 0, %v2523
          %v2525 = vrot.slane %v2520, %v2524
          %v2527 = vadd.f32 %v2519, %v2525
          %2528 = vst [vmem:[%s240] sm:$0xff] %v2527
        $region68: #{tpu_custom_call.1} parent=35 // pred_fallthru
          _
        %s2529 = sand.u32 %s133, 1
        %s2530 = scalar_lea.sflag [#allocation7], %s2529
        %s2531 = sand.u32 %s133, 1
        %s2532 = smul.addr %s2531, 8
        %s2533 = scalar_lea.vmem [#allocation11], %s2532
        // Predicated region
        $region69: #{tpu_custom_call.1} parent=35 // pred_check
          %p2534 = pneg %p143
        $region70: #{tpu_custom_call.1} parent=35 // pred_check_branch
          %2536 = sbr.rel (%p2534) target = $region72
        $region71: #{tpu_custom_call.1} parent=35 // pred_region
          %p2537 = scmp.eq.s32.totalorder %s24, 2
          %s2538 = scalar_select %p2537, %s25, 1
          %s2540 = ssub.s32 128, 128
          %2541 = vsyncadd %s2530, %s2540
          %s2542 = smul.addr %s2538, 128
          %s2543 = scalar_lea.hbm %s4, %s2542
          %s2545 = sshll.u32 %s2533, 4
          %s2546 = int_to_ptr.vmem [resolvable:$true] %s2545
          %2548 = dma.vmem_to_hbm [thread:$0]  %s2546, 128, %s2543, %s2530
        $region72: #{tpu_custom_call.1} parent=35 // pred_fallthru
          _
      $region36: #{tpu_custom_call.1} parent=5 // pred_fallthru
        _
      %p2549 = scmp.le.s32.totalorder 2, %s15
      // Predicated region
      $region73: #{tpu_custom_call.1} parent=5 // pred_check
        %p2550 = pneg %p2549
      $region74: #{tpu_custom_call.1} parent=5 // pred_check_branch
        %2552 = sbr.rel (%p2550) target = $region76
      $region75: #{tpu_custom_call.1} parent=5 // pred_region
        %s2553 = ssub.s32 %s15, 2
        // Predicated region
        $region77: #{tpu_custom_call.1} parent=75 // pred_check
          %p2554 = pneg %p149
        $region78: #{tpu_custom_call.1} parent=75 // pred_check_branch
          %2556 = sbr.rel (%p2554) target = $region80
        $region79: #{tpu_custom_call.1} parent=75 // pred_region
          %s2557 = sand.u32 %s134, 1
          %s2558 = scalar_lea.sflag [#allocation7], %s2557
          %s2559 = sand.u32 %s134, 1
          %s2560 = smul.addr %s2559, 8
          %s2561 = scalar_lea.vmem [#allocation11], %s2560
          %2562 = dma.done %s2558, 128
        $region80: #{tpu_custom_call.1} parent=75 // pred_fallthru
          _
      $region76: #{tpu_custom_call.1} parent=5 // pred_fallthru
        _
    $region6: #{tpu_custom_call.1} parent=1 // loop_footer
      %s19 = sadd.s32 1, %s15
    $region7: #{tpu_custom_call.1} parent=1 // loop_footer_branch
      %14 = sbr.rel target = $region3
    $region8: #{tpu_custom_call.1} parent=1 // loop_exit
      _
    %2563 = vsyncpa [#allocation6], 1
    %s2564 = scalar_lea.sflag [#allocation6], 1
    %2565 = vsyncpa %s2564, 1
    %2566 = vsyncpa [#allocation9], 1
    %2567 = vsyncpa [#allocation7], 1
    %s2568 = scalar_lea.sflag [#allocation7], 1
    %2569 = vsyncpa %s2568, 1

</llo_original>
